<compile_context>
chip_gen: v5e
topology: v5e:2x2
jax: 0.10.0
libtpu: 0.0.40
codegen_flags: <defaults>
</compile_context>

<pallas_src>
import functools
import math

import jax
import jax.numpy as jnp
from jax.experimental import pallas as pl
from jax.experimental.pallas import tpu as pltpu


def _round_up(x, m):
    return ((x + m - 1) // m) * m


def _round_down(x, m):
    return (x // m) * m


def _vmem_capacity_bytes():
    """Best-effort per-core VMEM capacity; conservative (v7x) fallback."""
    try:
        info = pltpu.get_tpu_info()
        cap = getattr(info, "vmem_capacity_bytes", None)
        if cap:
            return int(cap)
    except Exception:
        pass
    return 64 << 20


def _choose_tb(n_tok, tb_cap, per_tok_bytes, avail_bytes):
    """Pick a multiple-of-8 token-block size that fits the VMEM budget,
    preferring an exact divisor of n_tok so no padding / tail slice is needed."""
    fit = _round_down(max(avail_bytes, 0) // max(per_tok_bytes, 1), 8)
    tb_max = max(8, min(tb_cap, fit))
    if n_tok % 8 == 0:
        start = _round_down(min(tb_max, n_tok), 8)
        floor = min(start, 256)          # don't accept a pathologically tiny divisor
        for cand in range(start, floor - 1, -8):
            if n_tok % cand == 0:
                return cand, n_tok       # no padding, no tail slice
    tb = min(tb_max, _round_up(n_tok, 8))
    return tb, _round_up(n_tok, tb)


# ---------------------------------------------------------------------------
# Path A: VMEM-resident table, small vocab -> one-hot gather on the MXU.
# ---------------------------------------------------------------------------
def _onehot_kernel(ids_ref, tbl_ref, out_ref, *, scale):
    ids = ids_ref[...]                                    # (TB, 1) int32
    tbl = tbl_ref[...]                                    # (V, D)
    tb = ids.shape[0]
    v = tbl.shape[0]
    col = jax.lax.broadcasted_iota(jnp.int32, (tb, v), 1)
    onehot = (col == ids).astype(tbl.dtype)               # exact 0/1 selector
    acc = jnp.dot(onehot, tbl, preferred_element_type=jnp.float32)
    out_ref[...] = (acc * scale).astype(out_ref.dtype)


# ---------------------------------------------------------------------------
# Path B: VMEM-resident table -> 8 rows per iteration, dense (8, D) stores.
# ---------------------------------------------------------------------------
def _rowloop_kernel(ids_smem, tbl_ref, out_ref, *, scale, block_tokens, group):
    base = pl.program_id(0) * block_tokens

    def body(gi, carry):
        off = pl.multiple_of(gi * group, group)
        rows = [tbl_ref[pl.ds(ids_smem[base + off + g], 1), :]
                for g in range(group)]                     # group x (1, D)
        blk = jnp.concatenate(rows, axis=0).astype(jnp.float32) * scale
        out_ref[pl.ds(off, group), :] = blk.astype(out_ref.dtype)
        return carry

    jax.lax.fori_loop(0, block_tokens // group, body, 0, unroll=2)


# ---------------------------------------------------------------------------
# Path C: table too large for VMEM -> manual double-buffered DMA row gather.
# ---------------------------------------------------------------------------
def _dma_gather_kernel(ids_smem, tbl_hbm, out_ref, buf, sem, *,
                       scale, block_tokens, group):
    base = pl.program_id(0) * block_tokens
    n_groups = block_tokens // group

    def start_group(gi, slot):
        for g in range(group):
            tok = ids_smem[base + gi * group + g]
            pltpu.make_async_copy(
                tbl_hbm.at[pl.ds(tok, 1), :],
                buf.at[slot, pl.ds(g, 1), :],
                sem.at[slot, g],
            ).start()

    def wait_group(slot):
        for g in range(group):
            pltpu.make_async_copy(
                tbl_hbm.at[pl.ds(0, 1), :],
                buf.at[slot, pl.ds(g, 1), :],
                sem.at[slot, g],
            ).wait()

    start_group(0, 0)

    def body(gi, carry):
        slot = gi & 1
        wait_group(slot)

        @pl.when(gi + 1 < n_groups)
        def _():
            start_group(gi + 1, 1 - slot)     # keep next group's rows in flight

        rows = buf[slot].astype(jnp.float32) * scale        # (group, D)
        off = pl.multiple_of(gi * group, group)
        out_ref[pl.ds(off, group), :] = rows.astype(out_ref.dtype)
        return carry

    jax.lax.fori_loop(0, n_groups, body, 0)


# ---------------------------------------------------------------------------
# Wrapper
# ---------------------------------------------------------------------------
def embeddings_forward(token_ids, emb_table, *, one_hot_max_vocab=512,
                       _force_path=None):
    """token_ids: (B, S) int; emb_table: (V, D) -> (B, S, D)."""
    B, S = token_ids.shape
    V, D = emb_table.shape
    n_tok = B * S
    scale = float(math.sqrt(D))
    out_dtype = emb_table.dtype
    itemsize = jnp.dtype(out_dtype).itemsize

    cap = _vmem_capacity_bytes()
    budget = int(cap * 0.7)
    vmem_limit = int(min(int(cap * 0.85), 112 << 20))
    tb_cap = 1024 if cap >= (96 << 20) else 512     # bigger blocks on 128 MiB parts
    headroom = 2 << 20
    tbl_bytes = V * D * itemsize
    group = 8

    # Clamp ids (PyTorch raises on OOB; here OOB would read/DMA garbage).
    flat_ids = jnp.clip(token_ids.reshape(-1).astype(jnp.int32), 0, V - 1)

    # Per-token VMEM footprints (out double-buffer + path-specific temporaries).
    per_tok_a = 2 * D * itemsize + 8 * V + 4 * D     # + one-hot/iota + f32 acc
    per_tok_b = 2 * D * itemsize + 4 * D             # + f32 staging rows
    per_tok_c = 2 * D * itemsize

    resident_avail = budget - tbl_bytes - headroom   # single-buffered table

    def params():
        return pltpu.CompilerParams(dimension_semantics=("parallel",),
                                    vmem_limit_bytes=vmem_limit)

    def finish(out_flat, n_pad):
        if n_pad != n_tok:
            out_flat = out_flat[:n_tok]
        return out_flat.reshape(B, S, D)

    def pad_ids(n_pad):
        if n_pad != n_tok:
            return jnp.pad(flat_ids, (0, n_pad - n_tok))   # id 0 = valid row
        return flat_ids

    def table_spec(index_map, single_buffer):
        if single_buffer:
            try:   # constant block index -> one buffer is enough
                return pl.BlockSpec((V, D), index_map, pipeline_mode=pl.Buffered(1))
            except Exception:
                pass
        return pl.BlockSpec((V, D), index_map)

    # ---- Path A ----
    def run_onehot(single_buffer_table):
        tb, n_pad = _choose_tb(n_tok, tb_cap, per_tok_a, resident_avail)
        ids2d = pad_ids(n_pad).reshape(n_pad, 1)
        cost = pl.CostEstimate(
            flops=int(2 * n_pad * V * D), transcendentals=0,
            bytes_accessed=int(n_pad * 4 + tbl_bytes + n_pad * D * itemsize))
        out = pl.pallas_call(
            functools.partial(_onehot_kernel, scale=scale),
            out_shape=jax.ShapeDtypeStruct((n_pad, D), out_dtype),
            grid_spec=pltpu.PrefetchScalarGridSpec(
                num_scalar_prefetch=0,
                grid=(n_pad // tb,),
                in_specs=[pl.BlockSpec((tb, 1), lambda i: (i, 0)),
                          table_spec(lambda i: (0, 0), single_buffer_table)],
                out_specs=pl.BlockSpec((tb, D), lambda i: (i, 0)),
            ),
            compiler_params=params(),
            cost_estimate=cost,
        )(ids2d, emb_table)
        return finish(out, n_pad)

    # ---- Path B ----
    def run_rowloop(single_buffer_table):
        tb, n_pad = _choose_tb(n_tok, tb_cap, per_tok_b, resident_avail)
        ids = pad_ids(n_pad)
        cost = pl.CostEstimate(
            flops=int(n_pad * D), transcendentals=0,
            bytes_accessed=int(n_pad * 4 + tbl_bytes + n_pad * D * itemsize))
        out = pl.pallas_call(
            functools.partial(_rowloop_kernel, scale=scale,
                              block_tokens=tb, group=group),
            out_shape=jax.ShapeDtypeStruct((n_pad, D), out_dtype),
            grid_spec=pltpu.PrefetchScalarGridSpec(
                num_scalar_prefetch=1,
                grid=(n_pad // tb,),
                in_specs=[table_spec(lambda i, ids_ref: (0, 0),
                                     single_buffer_table)],
                out_specs=pl.BlockSpec((tb, D), lambda i, ids_ref: (i, 0)),
            ),
            compiler_params=params(),
            cost_estimate=cost,
        )(ids, emb_table)
        return finish(out, n_pad)

    # ---- Path C ----
    def run_dma_gather():
        avail_c = budget - headroom - 2 * group * D * itemsize
        tb, n_pad = _choose_tb(n_tok, tb_cap, per_tok_c, avail_c)
        ids = pad_ids(n_pad)
        cost = pl.CostEstimate(
            flops=int(n_pad * D), transcendentals=0,
            bytes_accessed=int(n_pad * 4 + 2 * n_pad * D * itemsize))
        out = pl.pallas_call(
            functools.partial(_dma_gather_kernel, scale=scale,
                              block_tokens=tb, group=group),
            out_shape=jax.ShapeDtypeStruct((n_pad, D), out_dtype),
            grid_spec=pltpu.PrefetchScalarGridSpec(
                num_scalar_prefetch=1,
                grid=(n_pad // tb,),
                in_specs=[pl.BlockSpec(memory_space=pl.ANY)],   # table stays in HBM
                out_specs=pl.BlockSpec((tb, D), lambda i, ids_ref: (i, 0)),
                scratch_shapes=[pltpu.VMEM((2, group, D), emb_table.dtype),
                                pltpu.SemaphoreType.DMA((2, group))],
            ),
            compiler_params=params(),
            cost_estimate=cost,
        )(ids, emb_table)
        return finish(out, n_pad)

    def with_table_fallback(run_fn):
        try:
            return run_fn(True)          # single-buffered resident table
        except Exception:
            return run_fn(False)         # default double-buffered table

    if _force_path == "onehot":
        return with_table_fallback(run_onehot)
    if _force_path == "rowloop":
        return with_table_fallback(run_rowloop)
    if _force_path == "dma":
        return run_dma_gather()

    can_onehot = (V <= one_hot_max_vocab) and resident_avail >= 8 * per_tok_a
    can_rowloop = resident_avail >= 8 * per_tok_b

    if can_onehot or can_rowloop:
        run_resident = run_onehot if can_onehot else run_rowloop
        try:
            return with_table_fallback(run_resident)
        except Exception:
            return run_dma_gather()      # marginal-fit safety net
    return run_dma_gather()


if __name__ == "__main__":
    key = jax.random.PRNGKey(0)
    k_emb, k_ids = jax.random.split(key)

    vocab_size, embed_dim = 64, 128
    batch, seq = 2, 8

    emb_table = jax.random.normal(k_emb, (vocab_size, embed_dim), jnp.float32)
    token_ids = jax.random.randint(k_ids, (batch, seq), 0, vocab_size, jnp.int32)

    ref = jnp.take(emb_table, token_ids, axis=0) * math.sqrt(embed_dim)

    # Auto path (small vocab -> resident table + one-hot MXU gather).
    out = jax.block_until_ready(embeddings_forward(token_ids, emb_table))
    assert out.shape == (batch, seq, embed_dim)
    assert jnp.allclose(out, ref, atol=1e-5, rtol=1e-5)

    # Resident-table row-loop path (Path B).
    out_b = jax.block_until_ready(
        embeddings_forward(token_ids, emb_table, _force_path="rowloop"))
    assert jnp.allclose(out_b, ref, atol=1e-5, rtol=1e-5)

    # Manual double-buffered DMA gather path (Path C, large-vocab fallback).
    out_c = jax.block_until_ready(
        embeddings_forward(token_ids, emb_table, _force_path="dma"))
    assert jnp.allclose(out_c, ref, atol=1e-5, rtol=1e-5)

    # Non-multiple-of-8 token count (padding + tail slice path).
    ids_odd = jax.random.randint(k_ids, (3, 5), 0, vocab_size, jnp.int32)
    ref_odd = jnp.take(emb_table, ids_odd, axis=0) * math.sqrt(embed_dim)
    out_odd = jax.block_until_ready(embeddings_forward(ids_odd, emb_table))
    assert jnp.allclose(out_odd, ref_odd, atol=1e-5, rtol=1e-5)

    print("KERNEL_OK")
</pallas_src>

<mosaic_0001>
module attributes {stable_mosaic.version = 11 : i64} {
  func.func @_onehot_kernel(%arg0: i32, %arg1: memref<16x1xi32, #tpu.memory_space<vmem>>, %arg2: memref<64x128xf32, #tpu.memory_space<vmem>>, %arg3: memref<16x128xf32, #tpu.memory_space<vmem>>) attributes {dimension_semantics = [#tpu.dimension_semantics<parallel>], iteration_bounds = array<i64: 1>, scalar_prefetch = 0 : i64, scratch_operands = 0 : i64, tpu.core_type = #tpu.core_type<tc>, window_params = [{transform_indices = @transform_0, window_bounds = array<i64: 16, 1>}, {pipeline_mode = #tpu.pipeline_mode<synchronous>, transform_indices = @transform_1, window_bounds = array<i64: 64, 128>}, {transform_indices = @transform_2, window_bounds = array<i64: 16, 128>}]} {
    %c0 = arith.constant 0 : index
    %c0_0 = arith.constant 0 : index
    %0 = vector.load %arg1[%c0, %c0_0] : memref<16x1xi32, #tpu.memory_space<vmem>>, vector<16x1xi32>
    %c0_1 = arith.constant 0 : index
    %c0_2 = arith.constant 0 : index
    %1 = vector.load %arg2[%c0_1, %c0_2] : memref<64x128xf32, #tpu.memory_space<vmem>>, vector<64x128xf32>
    %2 = tpu.iota {dimensions = array<i32: 1>} : vector<16x64xi32>
    %3 = vector.broadcast %0 : vector<16x1xi32> to vector<16x64xi32>
    %4 = arith.cmpi eq, %2, %3 : vector<16x64xi32>
    %5 = arith.extui %4 : vector<16x64xi1> to vector<16x64xi32>
    %6 = arith.sitofp %5 : vector<16x64xi32> to vector<16x64xf32>
    %cst = arith.constant dense<0.000000e+00> : vector<16x128xf32>
    %7 = tpu.matmul %6, %1, %cst {dimension_numbers = #tpu.dot_dimension_numbers<[1], [0], [0], [1], [0, 0, 1, 1], [], []>} : vector<16x64xf32>, vector<64x128xf32>, vector<16x128xf32> -> vector<16x128xf32>
    %cst_3 = arith.constant 11.3137083 : f32
    %8 = vector.broadcast %cst_3 : f32 to vector<16x128xf32>
    %9 = arith.mulf %7, %8 : vector<16x128xf32>
    %c0_4 = arith.constant 0 : index
    %c0_5 = arith.constant 0 : index
    %10 = vector.load %arg3[%c0_4, %c0_5] : memref<16x128xf32, #tpu.memory_space<vmem>>, vector<16x128xf32>
    tpu.vector_store %arg3[%c0_4, %c0_5], %9 {strides = array<i32>} : memref<16x128xf32, #tpu.memory_space<vmem>>, vector<16x128xf32>,
    return
  }
  func.func @transform_0(%arg0: i32) -> (i32, i32) {
    %c0_i32 = arith.constant 0 : i32
    %c0_i32_0 = arith.constant 0 : i32
    return %arg0, %c0_i32 : i32, i32
  }
  func.func @transform_1(%arg0: i32) -> (i32, i32) {
    %c0_i32 = arith.constant 0 : i32
    %c0_i32_0 = arith.constant 0 : i32
    %c0_i32_1 = arith.constant 0 : i32
    return %c0_i32, %c0_i32_0 : i32, i32
  }
  func.func @transform_2(%arg0: i32) -> (i32, i32) {
    %c0_i32 = arith.constant 0 : i32
    %c0_i32_0 = arith.constant 0 : i32
    return %arg0, %c0_i32 : i32, i32
  }
}

module attributes {stable_mosaic.version = 11 : i64} {
  func.func @_onehot_kernel(%arg0: i32, %arg1: memref<16x1xi32, #tpu.memory_space<vmem>>, %arg2: memref<64x128xf32, #tpu.memory_space<vmem>>, %arg3: memref<16x128xf32, #tpu.memory_space<vmem>>) attributes {dimension_semantics = [#tpu.dimension_semantics<parallel>], iteration_bounds = array<i64: 1>, scalar_prefetch = 0 : i64, scratch_operands = 0 : i64, tpu.core_type = #tpu.core_type<tc>, window_params = [{transform_indices = @transform_0, window_bounds = array<i64: 16, 1>}, {pipeline_mode = #tpu.pipeline_mode<synchronous>, transform_indices = @transform_1, window_bounds = array<i64: 64, 128>}, {transform_indices = @transform_2, window_bounds = array<i64: 16, 128>}]} {
    %c0 = arith.constant 0 : index
    %c0_0 = arith.constant 0 : index
    %0 = vector.load %arg1[%c0, %c0_0] : memref<16x1xi32, #tpu.memory_space<vmem>>, vector<16x1xi32>
    %c0_1 = arith.constant 0 : index
    %c0_2 = arith.constant 0 : index
    %1 = vector.load %arg2[%c0_1, %c0_2] : memref<64x128xf32, #tpu.memory_space<vmem>>, vector<64x128xf32>
    %2 = tpu.iota {dimensions = array<i32: 1>} : vector<16x64xi32>
    %3 = vector.broadcast %0 : vector<16x1xi32> to vector<16x64xi32>
    %4 = arith.cmpi eq, %2, %3 : vector<16x64xi32>
    %5 = arith.extui %4 : vector<16x64xi1> to vector<16x64xi32>
    %6 = arith.sitofp %5 : vector<16x64xi32> to vector<16x64xf32>
    %cst = arith.constant dense<0.000000e+00> : vector<16x128xf32>
    %7 = tpu.matmul %6, %1, %cst {dimension_numbers = #tpu.dot_dimension_numbers<[1], [0], [0], [1], [0, 0, 1, 1], [], []>} : vector<16x64xf32>, vector<64x128xf32>, vector<16x128xf32> -> vector<16x128xf32>
    %cst_3 = arith.constant 11.3137083 : f32
    %8 = vector.broadcast %cst_3 : f32 to vector<16x128xf32>
    %9 = arith.mulf %7, %8 : vector<16x128xf32>
    %c0_4 = arith.constant 0 : index
    %c0_5 = arith.constant 0 : index
    %10 = vector.load %arg3[%c0_4, %c0_5] : memref<16x128xf32, #tpu.memory_space<vmem>>, vector<16x128xf32>
    tpu.vector_store %arg3[%c0_4, %c0_5], %9 {strides = array<i32>} : memref<16x128xf32, #tpu.memory_space<vmem>>, vector<16x128xf32>,
    return
  }
  func.func @transform_0(%arg0: i32) -> (i32, i32) {
    %c0_i32 = arith.constant 0 : i32
    %c0_i32_0 = arith.constant 0 : i32
    return %arg0, %c0_i32 : i32, i32
  }
  func.func @transform_1(%arg0: i32) -> (i32, i32) {
    %c0_i32 = arith.constant 0 : i32
    %c0_i32_0 = arith.constant 0 : i32
    %c0_i32_1 = arith.constant 0 : i32
    return %c0_i32, %c0_i32_0 : i32, i32
  }
  func.func @transform_2(%arg0: i32) -> (i32, i32) {
    %c0_i32 = arith.constant 0 : i32
    %c0_i32_0 = arith.constant 0 : i32
    return %arg0, %c0_i32 : i32, i32
  }
}

module attributes {stable_mosaic.version = 11 : i64} {
  func.func @_dma_gather_kernel(%arg0: i32, %arg1: memref<16xi32, #tpu.memory_space<smem>>, %arg2: memref<64x128xf32, #tpu.memory_space<any>>, %arg3: memref<16x128xf32, #tpu.memory_space<vmem>>, %arg4: memref<2x8x128xf32, #tpu.memory_space<vmem>>, %arg5: memref<2x8x!tpu.dma_semaphore, #tpu.memory_space<semaphore_mem>>) attributes {dimension_semantics = [#tpu.dimension_semantics<parallel>], iteration_bounds = array<i64: 1>, scalar_prefetch = 1 : i64, scratch_operands = 2 : i64, tpu.core_type = #tpu.core_type<tc>, window_params = [{}, {transform_indices = @transform_1, window_bounds = array<i64: 16, 128>}]} {
    %c16_i32 = arith.constant 16 : i32
    %0 = arith.muli %arg0, %c16_i32 : i32
    %c0_i32 = arith.constant 0 : i32
    %1 = arith.addi %0, %c0_i32 : i32
    %c0_i32_0 = arith.constant 0 : i32
    %2 = arith.addi %1, %c0_i32_0 : i32
    %3 = arith.index_cast %2 : i32 to index
    %4 = memref.load %arg1[%3] : memref<16xi32, #tpu.memory_space<smem>>
    %c0_i32_1 = arith.constant 0 : i32
    %c0_i32_2 = arith.constant 0 : i32
    %c0_i32_3 = arith.constant 0 : i32
    %c0_i32_4 = arith.constant 0 : i32
    %5 = tpu.memref_slice %arg2[%4, %c0_i32_4] : memref<64x128xf32, #tpu.memory_space<any>> -> memref<1x128xf32, #tpu.memory_space<any>>
    %c0_i32_5 = arith.constant 0 : i32
    %c0_i32_6 = arith.constant 0 : i32
    %6 = tpu.memref_slice %arg4[%c0_i32_1, %c0_i32_5, %c0_i32_6] : memref<2x8x128xf32, #tpu.memory_space<vmem>> -> memref<1x1x128xf32, #tpu.memory_space<vmem>>
    %7 = tpu.memref_squeeze %6 : memref<1x1x128xf32, #tpu.memory_space<vmem>> -> memref<1x128xf32, #tpu.memory_space<vmem>>
    %8 = tpu.memref_slice %arg5[%c0_i32_2, %c0_i32_3] : memref<2x8x!tpu.dma_semaphore, #tpu.memory_space<semaphore_mem>> -> memref<1x1x!tpu.dma_semaphore, #tpu.memory_space<semaphore_mem>>
    %9 = tpu.memref_squeeze %8 : memref<1x1x!tpu.dma_semaphore, #tpu.memory_space<semaphore_mem>> -> memref<!tpu.dma_semaphore, #tpu.memory_space<semaphore_mem>>
    tpu.enqueue_dma source(%5 : memref<1x128xf32, #tpu.memory_space<any>>) target(%7 : memref<1x128xf32, #tpu.memory_space<vmem>>) target_semaphore(%9 : memref<!tpu.dma_semaphore, #tpu.memory_space<semaphore_mem>>)
    %c0_i32_7 = arith.constant 0 : i32
    %10 = arith.addi %0, %c0_i32_7 : i32
    %c1_i32 = arith.constant 1 : i32
    %11 = arith.addi %10, %c1_i32 : i32
    %12 = arith.index_cast %11 : i32 to index
    %13 = memref.load %arg1[%12] : memref<16xi32, #tpu.memory_space<smem>>
    %c0_i32_8 = arith.constant 0 : i32
    %c0_i32_9 = arith.constant 0 : i32
    %c1_i32_10 = arith.constant 1 : i32
    %c0_i32_11 = arith.constant 0 : i32
    %14 = tpu.memref_slice %arg2[%13, %c0_i32_11] : memref<64x128xf32, #tpu.memory_space<any>> -> memref<1x128xf32, #tpu.memory_space<any>>
    %c1_i32_12 = arith.constant 1 : i32
    %c0_i32_13 = arith.constant 0 : i32
    %15 = tpu.memref_slice %arg4[%c0_i32_8, %c1_i32_12, %c0_i32_13] : memref<2x8x128xf32, #tpu.memory_space<vmem>> -> memref<1x1x128xf32, #tpu.memory_space<vmem>>
    %16 = tpu.memref_squeeze %15 : memref<1x1x128xf32, #tpu.memory_space<vmem>> -> memref<1x128xf32, #tpu.memory_space<vmem>>
    %17 = tpu.memref_slice %arg5[%c0_i32_9, %c1_i32_10] : memref<2x8x!tpu.dma_semaphore, #tpu.memory_space<semaphore_mem>> -> memref<1x1x!tpu.dma_semaphore, #tpu.memory_space<semaphore_mem>>
    %18 = tpu.memref_squeeze %17 : memref<1x1x!tpu.dma_semaphore, #tpu.memory_space<semaphore_mem>> -> memref<!tpu.dma_semaphore, #tpu.memory_space<semaphore_mem>>
    tpu.enqueue_dma source(%14 : memref<1x128xf32, #tpu.memory_space<any>>) target(%16 : memref<1x128xf32, #tpu.memory_space<vmem>>) target_semaphore(%18 : memref<!tpu.dma_semaphore, #tpu.memory_space<semaphore_mem>>)
    %c0_i32_14 = arith.constant 0 : i32
    %19 = arith.addi %0, %c0_i32_14 : i32
    %c2_i32 = arith.constant 2 : i32
    %20 = arith.addi %19, %c2_i32 : i32
    %21 = arith.index_cast %20 : i32 to index
    %22 = memref.load %arg1[%21] : memref<16xi32, #tpu.memory_space<smem>>
    %c0_i32_15 = arith.constant 0 : i32
    %c0_i32_16 = arith.constant 0 : i32
    %c2_i32_17 = arith.constant 2 : i32
    %c0_i32_18 = arith.constant 0 : i32
    %23 = tpu.memref_slice %arg2[%22, %c0_i32_18] : memref<64x128xf32, #tpu.memory_space<any>> -> memref<1x128xf32, #tpu.memory_space<any>>
    %c2_i32_19 = arith.constant 2 : i32
    %c0_i32_20 = arith.constant 0 : i32
    %24 = tpu.memref_slice %arg4[%c0_i32_15, %c2_i32_19, %c0_i32_20] : memref<2x8x128xf32, #tpu.memory_space<vmem>> -> memref<1x1x128xf32, #tpu.memory_space<vmem>>
    %25 = tpu.memref_squeeze %24 : memref<1x1x128xf32, #tpu.memory_space<vmem>> -> memref<1x128xf32, #tpu.memory_space<vmem>>
    %26 = tpu.memref_slice %arg5[%c0_i32_16, %c2_i32_17] : memref<2x8x!tpu.dma_semaphore, #tpu.memory_space<semaphore_mem>> -> memref<1x1x!tpu.dma_semaphore, #tpu.memory_space<semaphore_mem>>
    %27 = tpu.memref_squeeze %26 : memref<1x1x!tpu.dma_semaphore, #tpu.memory_space<semaphore_mem>> -> memref<!tpu.dma_semaphore, #tpu.memory_space<semaphore_mem>>
    tpu.enqueue_dma source(%23 : memref<1x128xf32, #tpu.memory_space<any>>) target(%25 : memref<1x128xf32, #tpu.memory_space<vmem>>) target_semaphore(%27 : memref<!tpu.dma_semaphore, #tpu.memory_space<semaphore_mem>>)
    %c0_i32_21 = arith.constant 0 : i32
    %28 = arith.addi %0, %c0_i32_21 : i32
    %c3_i32 = arith.constant 3 : i32
    %29 = arith.addi %28, %c3_i32 : i32
    %30 = arith.index_cast %29 : i32 to index
    %31 = memref.load %arg1[%30] : memref<16xi32, #tpu.memory_space<smem>>
    %c0_i32_22 = arith.constant 0 : i32
    %c0_i32_23 = arith.constant 0 : i32
    %c3_i32_24 = arith.constant 3 : i32
    %c0_i32_25 = arith.constant 0 : i32
    %32 = tpu.memref_slice %arg2[%31, %c0_i32_25] : memref<64x128xf32, #tpu.memory_space<any>> -> memref<1x128xf32, #tpu.memory_space<any>>
    %c3_i32_26 = arith.constant 3 : i32
    %c0_i32_27 = arith.constant 0 : i32
    %33 = tpu.memref_slice %arg4[%c0_i32_22, %c3_i32_26, %c0_i32_27] : memref<2x8x128xf32, #tpu.memory_space<vmem>> -> memref<1x1x128xf32, #tpu.memory_space<vmem>>
    %34 = tpu.memref_squeeze %33 : memref<1x1x128xf32, #tpu.memory_space<vmem>> -> memref<1x128xf32, #tpu.memory_space<vmem>>
    %35 = tpu.memref_slice %arg5[%c0_i32_23, %c3_i32_24] : memref<2x8x!tpu.dma_semaphore, #tpu.memory_space<semaphore_mem>> -> memref<1x1x!tpu.dma_semaphore, #tpu.memory_space<semaphore_mem>>
    %36 = tpu.memref_squeeze %35 : memref<1x1x!tpu.dma_semaphore, #tpu.memory_space<semaphore_mem>> -> memref<!tpu.dma_semaphore, #tpu.memory_space<semaphore_mem>>
    tpu.enqueue_dma source(%32 : memref<1x128xf32, #tpu.memory_space<any>>) target(%34 : memref<1x128xf32, #tpu.memory_space<vmem>>) target_semaphore(%36 : memref<!tpu.dma_semaphore, #tpu.memory_space<semaphore_mem>>)
    %c0_i32_28 = arith.constant 0 : i32
    %37 = arith.addi %0, %c0_i32_28 : i32
    %c4_i32 = arith.constant 4 : i32
    %38 = arith.addi %37, %c4_i32 : i32
    %39 = arith.index_cast %38 : i32 to index
    %40 = memref.load %arg1[%39] : memref<16xi32, #tpu.memory_space<smem>>
    %c0_i32_29 = arith.constant 0 : i32
    %c0_i32_30 = arith.constant 0 : i32
    %c4_i32_31 = arith.constant 4 : i32
    %c0_i32_32 = arith.constant 0 : i32
    %41 = tpu.memref_slice %arg2[%40, %c0_i32_32] : memref<64x128xf32, #tpu.memory_space<any>> -> memref<1x128xf32, #tpu.memory_space<any>>
    %c4_i32_33 = arith.constant 4 : i32
    %c0_i32_34 = arith.constant 0 : i32
    %42 = tpu.memref_slice %arg4[%c0_i32_29, %c4_i32_33, %c0_i32_34] : memref<2x8x128xf32, #tpu.memory_space<vmem>> -> memref<1x1x128xf32, #tpu.memory_space<vmem>>
    %43 = tpu.memref_squeeze %42 : memref<1x1x128xf32, #tpu.memory_space<vmem>> -> memref<1x128xf32, #tpu.memory_space<vmem>>
    %44 = tpu.memref_slice %arg5[%c0_i32_30, %c4_i32_31] : memref<2x8x!tpu.dma_semaphore, #tpu.memory_space<semaphore_mem>> -> memref<1x1x!tpu.dma_semaphore, #tpu.memory_space<semaphore_mem>>
    %45 = tpu.memref_squeeze %44 : memref<1x1x!tpu.dma_semaphore, #tpu.memory_space<semaphore_mem>> -> memref<!tpu.dma_semaphore, #tpu.memory_space<semaphore_mem>>
    tpu.enqueue_dma source(%41 : memref<1x128xf32, #tpu.memory_space<any>>) target(%43 : memref<1x128xf32, #tpu.memory_space<vmem>>) target_semaphore(%45 : memref<!tpu.dma_semaphore, #tpu.memory_space<semaphore_mem>>)
    %c0_i32_35 = arith.constant 0 : i32
    %46 = arith.addi %0, %c0_i32_35 : i32
    %c5_i32 = arith.constant 5 : i32
    %47 = arith.addi %46, %c5_i32 : i32
    %48 = arith.index_cast %47 : i32 to index
    %49 = memref.load %arg1[%48] : memref<16xi32, #tpu.memory_space<smem>>
    %c0_i32_36 = arith.constant 0 : i32
    %c0_i32_37 = arith.constant 0 : i32
    %c5_i32_38 = arith.constant 5 : i32
    %c0_i32_39 = arith.constant 0 : i32
    %50 = tpu.memref_slice %arg2[%49, %c0_i32_39] : memref<64x128xf32, #tpu.memory_space<any>> -> memref<1x128xf32, #tpu.memory_space<any>>
    %c5_i32_40 = arith.constant 5 : i32
    %c0_i32_41 = arith.constant 0 : i32
    %51 = tpu.memref_slice %arg4[%c0_i32_36, %c5_i32_40, %c0_i32_41] : memref<2x8x128xf32, #tpu.memory_space<vmem>> -> memref<1x1x128xf32, #tpu.memory_space<vmem>>
    %52 = tpu.memref_squeeze %51 : memref<1x1x128xf32, #tpu.memory_space<vmem>> -> memref<1x128xf32, #tpu.memory_space<vmem>>
    %53 = tpu.memref_slice %arg5[%c0_i32_37, %c5_i32_38] : memref<2x8x!tpu.dma_semaphore, #tpu.memory_space<semaphore_mem>> -> memref<1x1x!tpu.dma_semaphore, #tpu.memory_space<semaphore_mem>>
    %54 = tpu.memref_squeeze %53 : memref<1x1x!tpu.dma_semaphore, #tpu.memory_space<semaphore_mem>> -> memref<!tpu.dma_semaphore, #tpu.memory_space<semaphore_mem>>
    tpu.enqueue_dma source(%50 : memref<1x128xf32, #tpu.memory_space<any>>) target(%52 : memref<1x128xf32, #tpu.memory_space<vmem>>) target_semaphore(%54 : memref<!tpu.dma_semaphore, #tpu.memory_space<semaphore_mem>>)
    %c0_i32_42 = arith.constant 0 : i32
    %55 = arith.addi %0, %c0_i32_42 : i32
    %c6_i32 = arith.constant 6 : i32
    %56 = arith.addi %55, %c6_i32 : i32
    %57 = arith.index_cast %56 : i32 to index
    %58 = memref.load %arg1[%57] : memref<16xi32, #tpu.memory_space<smem>>
    %c0_i32_43 = arith.constant 0 : i32
    %c0_i32_44 = arith.constant 0 : i32
    %c6_i32_45 = arith.constant 6 : i32
    %c0_i32_46 = arith.constant 0 : i32
    %59 = tpu.memref_slice %arg2[%58, %c0_i32_46] : memref<64x128xf32, #tpu.memory_space<any>> -> memref<1x128xf32, #tpu.memory_space<any>>
    %c6_i32_47 = arith.constant 6 : i32
    %c0_i32_48 = arith.constant 0 : i32
    %60 = tpu.memref_slice %arg4[%c0_i32_43, %c6_i32_47, %c0_i32_48] : memref<2x8x128xf32, #tpu.memory_space<vmem>> -> memref<1x1x128xf32, #tpu.memory_space<vmem>>
    %61 = tpu.memref_squeeze %60 : memref<1x1x128xf32, #tpu.memory_space<vmem>> -> memref<1x128xf32, #tpu.memory_space<vmem>>
    %62 = tpu.memref_slice %arg5[%c0_i32_44, %c6_i32_45] : memref<2x8x!tpu.dma_semaphore, #tpu.memory_space<semaphore_mem>> -> memref<1x1x!tpu.dma_semaphore, #tpu.memory_space<semaphore_mem>>
    %63 = tpu.memref_squeeze %62 : memref<1x1x!tpu.dma_semaphore, #tpu.memory_space<semaphore_mem>> -> memref<!tpu.dma_semaphore, #tpu.memory_space<semaphore_mem>>
    tpu.enqueue_dma source(%59 : memref<1x128xf32, #tpu.memory_space<any>>) target(%61 : memref<1x128xf32, #tpu.memory_space<vmem>>) target_semaphore(%63 : memref<!tpu.dma_semaphore, #tpu.memory_space<semaphore_mem>>)
    %c0_i32_49 = arith.constant 0 : i32
    %64 = arith.addi %0, %c0_i32_49 : i32
    %c7_i32 = arith.constant 7 : i32
    %65 = arith.addi %64, %c7_i32 : i32
    %66 = arith.index_cast %65 : i32 to index
    %67 = memref.load %arg1[%66] : memref<16xi32, #tpu.memory_space<smem>>
    %c0_i32_50 = arith.constant 0 : i32
    %c0_i32_51 = arith.constant 0 : i32
    %c7_i32_52 = arith.constant 7 : i32
    %c0_i32_53 = arith.constant 0 : i32
    %68 = tpu.memref_slice %arg2[%67, %c0_i32_53] : memref<64x128xf32, #tpu.memory_space<any>> -> memref<1x128xf32, #tpu.memory_space<any>>
    %c7_i32_54 = arith.constant 7 : i32
    %c0_i32_55 = arith.constant 0 : i32
    %69 = tpu.memref_slice %arg4[%c0_i32_50, %c7_i32_54, %c0_i32_55] : memref<2x8x128xf32, #tpu.memory_space<vmem>> -> memref<1x1x128xf32, #tpu.memory_space<vmem>>
    %70 = tpu.memref_squeeze %69 : memref<1x1x128xf32, #tpu.memory_space<vmem>> -> memref<1x128xf32, #tpu.memory_space<vmem>>
    %71 = tpu.memref_slice %arg5[%c0_i32_51, %c7_i32_52] : memref<2x8x!tpu.dma_semaphore, #tpu.memory_space<semaphore_mem>> -> memref<1x1x!tpu.dma_semaphore, #tpu.memory_space<semaphore_mem>>
    %72 = tpu.memref_squeeze %71 : memref<1x1x!tpu.dma_semaphore, #tpu.memory_space<semaphore_mem>> -> memref<!tpu.dma_semaphore, #tpu.memory_space<semaphore_mem>>
    tpu.enqueue_dma source(%68 : memref<1x128xf32, #tpu.memory_space<any>>) target(%70 : memref<1x128xf32, #tpu.memory_space<vmem>>) target_semaphore(%72 : memref<!tpu.dma_semaphore, #tpu.memory_space<semaphore_mem>>)
    %c0_i32_56 = arith.constant 0 : i32
    %c2_i32_57 = arith.constant 2 : i32
    %73 = arith.addi %c0_i32_56, %c2_i32_57 : i32
    %c1_i32_58 = arith.constant 1 : i32
    scf.for %arg6 = %c0_i32_56 to %73 step %c1_i32_58  : i32 {
      %c1_i32_60 = arith.constant 1 : i32
      %74 = arith.andi %arg6, %c1_i32_60 : i32
      %c0_i32_61 = arith.constant 0 : i32
      %c0_i32_62 = arith.constant 0 : i32
      %c0_i32_63 = arith.constant 0 : i32
      %75 = tpu.memref_slice %arg2[%c0_i32_62, %c0_i32_63] : memref<64x128xf32, #tpu.memory_space<any>> -> memref<1x128xf32, #tpu.memory_space<any>>
      %c0_i32_64 = arith.constant 0 : i32
      %c0_i32_65 = arith.constant 0 : i32
      %76 = tpu.memref_slice %arg4[%74, %c0_i32_64, %c0_i32_65] : memref<2x8x128xf32, #tpu.memory_space<vmem>> -> memref<1x1x128xf32, #tpu.memory_space<vmem>>
      %77 = tpu.memref_squeeze %76 : memref<1x1x128xf32, #tpu.memory_space<vmem>> -> memref<1x128xf32, #tpu.memory_space<vmem>>
      %78 = tpu.memref_slice %arg5[%74, %c0_i32_61] : memref<2x8x!tpu.dma_semaphore, #tpu.memory_space<semaphore_mem>> -> memref<1x1x!tpu.dma_semaphore, #tpu.memory_space<semaphore_mem>>
      %79 = tpu.memref_squeeze %78 : memref<1x1x!tpu.dma_semaphore, #tpu.memory_space<semaphore_mem>> -> memref<!tpu.dma_semaphore, #tpu.memory_space<semaphore_mem>>
      tpu.wait_dma2 semaphore(%79 : memref<!tpu.dma_semaphore, #tpu.memory_space<semaphore_mem>>) src(%75 : memref<1x128xf32, #tpu.memory_space<any>>) dst(%77 : memref<1x128xf32, #tpu.memory_space<vmem>>)
      %c1_i32_66 = arith.constant 1 : i32
      %c0_i32_67 = arith.constant 0 : i32
      %c0_i32_68 = arith.constant 0 : i32
      %80 = tpu.memref_slice %arg2[%c0_i32_67, %c0_i32_68] : memref<64x128xf32, #tpu.memory_space<any>> -> memref<1x128xf32, #tpu.memory_space<any>>
      %c1_i32_69 = arith.constant 1 : i32
      %c0_i32_70 = arith.constant 0 : i32
      %81 = tpu.memref_slice %arg4[%74, %c1_i32_69, %c0_i32_70] : memref<2x8x128xf32, #tpu.memory_space<vmem>> -> memref<1x1x128xf32, #tpu.memory_space<vmem>>
      %82 = tpu.memref_squeeze %81 : memref<1x1x128xf32, #tpu.memory_space<vmem>> -> memref<1x128xf32, #tpu.memory_space<vmem>>
      %83 = tpu.memref_slice %arg5[%74, %c1_i32_66] : memref<2x8x!tpu.dma_semaphore, #tpu.memory_space<semaphore_mem>> -> memref<1x1x!tpu.dma_semaphore, #tpu.memory_space<semaphore_mem>>
      %84 = tpu.memref_squeeze %83 : memref<1x1x!tpu.dma_semaphore, #tpu.memory_space<semaphore_mem>> -> memref<!tpu.dma_semaphore, #tpu.memory_space<semaphore_mem>>
      tpu.wait_dma2 semaphore(%84 : memref<!tpu.dma_semaphore, #tpu.memory_space<semaphore_mem>>) src(%80 : memref<1x128xf32, #tpu.memory_space<any>>) dst(%82 : memref<1x128xf32, #tpu.memory_space<vmem>>)
      %c2_i32_71 = arith.constant 2 : i32
      %c0_i32_72 = arith.constant 0 : i32
      %c0_i32_73 = arith.constant 0 : i32
      %85 = tpu.memref_slice %arg2[%c0_i32_72, %c0_i32_73] : memref<64x128xf32, #tpu.memory_space<any>> -> memref<1x128xf32, #tpu.memory_space<any>>
      %c2_i32_74 = arith.constant 2 : i32
      %c0_i32_75 = arith.constant 0 : i32
      %86 = tpu.memref_slice %arg4[%74, %c2_i32_74, %c0_i32_75] : memref<2x8x128xf32, #tpu.memory_space<vmem>> -> memref<1x1x128xf32, #tpu.memory_space<vmem>>
      %87 = tpu.memref_squeeze %86 : memref<1x1x128xf32, #tpu.memory_space<vmem>> -> memref<1x128xf32, #tpu.memory_space<vmem>>
      %88 = tpu.memref_slice %arg5[%74, %c2_i32_71] : memref<2x8x!tpu.dma_semaphore, #tpu.memory_space<semaphore_mem>> -> memref<1x1x!tpu.dma_semaphore, #tpu.memory_space<semaphore_mem>>
      %89 = tpu.memref_squeeze %88 : memref<1x1x!tpu.dma_semaphore, #tpu.memory_space<semaphore_mem>> -> memref<!tpu.dma_semaphore, #tpu.memory_space<semaphore_mem>>
      tpu.wait_dma2 semaphore(%89 : memref<!tpu.dma_semaphore, #tpu.memory_space<semaphore_mem>>) src(%85 : memref<1x128xf32, #tpu.memory_space<any>>) dst(%87 : memref<1x128xf32, #tpu.memory_space<vmem>>)
      %c3_i32_76 = arith.constant 3 : i32
      %c0_i32_77 = arith.constant 0 : i32
      %c0_i32_78 = arith.constant 0 : i32
      %90 = tpu.memref_slice %arg2[%c0_i32_77, %c0_i32_78] : memref<64x128xf32, #tpu.memory_space<any>> -> memref<1x128xf32, #tpu.memory_space<any>>
      %c3_i32_79 = arith.constant 3 : i32
      %c0_i32_80 = arith.constant 0 : i32
      %91 = tpu.memref_slice %arg4[%74, %c3_i32_79, %c0_i32_80] : memref<2x8x128xf32, #tpu.memory_space<vmem>> -> memref<1x1x128xf32, #tpu.memory_space<vmem>>
      %92 = tpu.memref_squeeze %91 : memref<1x1x128xf32, #tpu.memory_space<vmem>> -> memref<1x128xf32, #tpu.memory_space<vmem>>
      %93 = tpu.memref_slice %arg5[%74, %c3_i32_76] : memref<2x8x!tpu.dma_semaphore, #tpu.memory_space<semaphore_mem>> -> memref<1x1x!tpu.dma_semaphore, #tpu.memory_space<semaphore_mem>>
      %94 = tpu.memref_squeeze %93 : memref<1x1x!tpu.dma_semaphore, #tpu.memory_space<semaphore_mem>> -> memref<!tpu.dma_semaphore, #tpu.memory_space<semaphore_mem>>
      tpu.wait_dma2 semaphore(%94 : memref<!tpu.dma_semaphore, #tpu.memory_space<semaphore_mem>>) src(%90 : memref<1x128xf32, #tpu.memory_space<any>>) dst(%92 : memref<1x128xf32, #tpu.memory_space<vmem>>)
      %c4_i32_81 = arith.constant 4 : i32
      %c0_i32_82 = arith.constant 0 : i32
      %c0_i32_83 = arith.constant 0 : i32
      %95 = tpu.memref_slice %arg2[%c0_i32_82, %c0_i32_83] : memref<64x128xf32, #tpu.memory_space<any>> -> memref<1x128xf32, #tpu.memory_space<any>>
      %c4_i32_84 = arith.constant 4 : i32
      %c0_i32_85 = arith.constant 0 : i32
      %96 = tpu.memref_slice %arg4[%74, %c4_i32_84, %c0_i32_85] : memref<2x8x128xf32, #tpu.memory_space<vmem>> -> memref<1x1x128xf32, #tpu.memory_space<vmem>>
      %97 = tpu.memref_squeeze %96 : memref<1x1x128xf32, #tpu.memory_space<vmem>> -> memref<1x128xf32, #tpu.memory_space<vmem>>
      %98 = tpu.memref_slice %arg5[%74, %c4_i32_81] : memref<2x8x!tpu.dma_semaphore, #tpu.memory_space<semaphore_mem>> -> memref<1x1x!tpu.dma_semaphore, #tpu.memory_space<semaphore_mem>>
      %99 = tpu.memref_squeeze %98 : memref<1x1x!tpu.dma_semaphore, #tpu.memory_space<semaphore_mem>> -> memref<!tpu.dma_semaphore, #tpu.memory_space<semaphore_mem>>
      tpu.wait_dma2 semaphore(%99 : memref<!tpu.dma_semaphore, #tpu.memory_space<semaphore_mem>>) src(%95 : memref<1x128xf32, #tpu.memory_space<any>>) dst(%97 : memref<1x128xf32, #tpu.memory_space<vmem>>)
      %c5_i32_86 = arith.constant 5 : i32
      %c0_i32_87 = arith.constant 0 : i32
      %c0_i32_88 = arith.constant 0 : i32
      %100 = tpu.memref_slice %arg2[%c0_i32_87, %c0_i32_88] : memref<64x128xf32, #tpu.memory_space<any>> -> memref<1x128xf32, #tpu.memory_space<any>>
      %c5_i32_89 = arith.constant 5 : i32
      %c0_i32_90 = arith.constant 0 : i32
      %101 = tpu.memref_slice %arg4[%74, %c5_i32_89, %c0_i32_90] : memref<2x8x128xf32, #tpu.memory_space<vmem>> -> memref<1x1x128xf32, #tpu.memory_space<vmem>>
      %102 = tpu.memref_squeeze %101 : memref<1x1x128xf32, #tpu.memory_space<vmem>> -> memref<1x128xf32, #tpu.memory_space<vmem>>
      %103 = tpu.memref_slice %arg5[%74, %c5_i32_86] : memref<2x8x!tpu.dma_semaphore, #tpu.memory_space<semaphore_mem>> -> memref<1x1x!tpu.dma_semaphore, #tpu.memory_space<semaphore_mem>>
      %104 = tpu.memref_squeeze %103 : memref<1x1x!tpu.dma_semaphore, #tpu.memory_space<semaphore_mem>> -> memref<!tpu.dma_semaphore, #tpu.memory_space<semaphore_mem>>
      tpu.wait_dma2 semaphore(%104 : memref<!tpu.dma_semaphore, #tpu.memory_space<semaphore_mem>>) src(%100 : memref<1x128xf32, #tpu.memory_space<any>>) dst(%102 : memref<1x128xf32, #tpu.memory_space<vmem>>)
      %c6_i32_91 = arith.constant 6 : i32
      %c0_i32_92 = arith.constant 0 : i32
      %c0_i32_93 = arith.constant 0 : i32
      %105 = tpu.memref_slice %arg2[%c0_i32_92, %c0_i32_93] : memref<64x128xf32, #tpu.memory_space<any>> -> memref<1x128xf32, #tpu.memory_space<any>>
      %c6_i32_94 = arith.constant 6 : i32
      %c0_i32_95 = arith.constant 0 : i32
      %106 = tpu.memref_slice %arg4[%74, %c6_i32_94, %c0_i32_95] : memref<2x8x128xf32, #tpu.memory_space<vmem>> -> memref<1x1x128xf32, #tpu.memory_space<vmem>>
      %107 = tpu.memref_squeeze %106 : memref<1x1x128xf32, #tpu.memory_space<vmem>> -> memref<1x128xf32, #tpu.memory_space<vmem>>
      %108 = tpu.memref_slice %arg5[%74, %c6_i32_91] : memref<2x8x!tpu.dma_semaphore, #tpu.memory_space<semaphore_mem>> -> memref<1x1x!tpu.dma_semaphore, #tpu.memory_space<semaphore_mem>>
      %109 = tpu.memref_squeeze %108 : memref<1x1x!tpu.dma_semaphore, #tpu.memory_space<semaphore_mem>> -> memref<!tpu.dma_semaphore, #tpu.memory_space<semaphore_mem>>
      tpu.wait_dma2 semaphore(%109 : memref<!tpu.dma_semaphore, #tpu.memory_space<semaphore_mem>>) src(%105 : memref<1x128xf32, #tpu.memory_space<any>>) dst(%107 : memref<1x128xf32, #tpu.memory_space<vmem>>)
      %c7_i32_96 = arith.constant 7 : i32
      %c0_i32_97 = arith.constant 0 : i32
      %c0_i32_98 = arith.constant 0 : i32
      %110 = tpu.memref_slice %arg2[%c0_i32_97, %c0_i32_98] : memref<64x128xf32, #tpu.memory_space<any>> -> memref<1x128xf32, #tpu.memory_space<any>>
      %c7_i32_99 = arith.constant 7 : i32
      %c0_i32_100 = arith.constant 0 : i32
      %111 = tpu.memref_slice %arg4[%74, %c7_i32_99, %c0_i32_100] : memref<2x8x128xf32, #tpu.memory_space<vmem>> -> memref<1x1x128xf32, #tpu.memory_space<vmem>>
      %112 = tpu.memref_squeeze %111 : memref<1x1x128xf32, #tpu.memory_space<vmem>> -> memref<1x128xf32, #tpu.memory_space<vmem>>
      %113 = tpu.memref_slice %arg5[%74, %c7_i32_96] : memref<2x8x!tpu.dma_semaphore, #tpu.memory_space<semaphore_mem>> -> memref<1x1x!tpu.dma_semaphore, #tpu.memory_space<semaphore_mem>>
      %114 = tpu.memref_squeeze %113 : memref<1x1x!tpu.dma_semaphore, #tpu.memory_space<semaphore_mem>> -> memref<!tpu.dma_semaphore, #tpu.memory_space<semaphore_mem>>
      tpu.wait_dma2 semaphore(%114 : memref<!tpu.dma_semaphore, #tpu.memory_space<semaphore_mem>>) src(%110 : memref<1x128xf32, #tpu.memory_space<any>>) dst(%112 : memref<1x128xf32, #tpu.memory_space<vmem>>)
      %c1_i32_101 = arith.constant 1 : i32
      %115 = arith.addi %arg6, %c1_i32_101 : i32
      %c2_i32_102 = arith.constant 2 : i32
      %116 = arith.cmpi slt, %115, %c2_i32_102 : i32
      %117 = arith.extui %116 : i1 to i32
      %c0_i32_103 = arith.constant 0 : i32
      %118 = arith.cmpi ne, %117, %c0_i32_103 : i32
      scf.if %118 {
        %c1_i32_106 = arith.constant 1 : i32
        %128 = arith.addi %arg6, %c1_i32_106 : i32
        %c1_i32_107 = arith.constant 1 : i32
        %129 = arith.subi %c1_i32_107, %74 : i32
        %c8_i32_108 = arith.constant 8 : i32
        %130 = arith.muli %128, %c8_i32_108 : i32
        %131 = arith.addi %0, %130 : i32
        %c0_i32_109 = arith.constant 0 : i32
        %132 = arith.addi %131, %c0_i32_109 : i32
        %133 = arith.index_cast %132 : i32 to index
        %134 = memref.load %arg1[%133] : memref<16xi32, #tpu.memory_space<smem>>
        %c0_i32_110 = arith.constant 0 : i32
        %c0_i32_111 = arith.constant 0 : i32
        %135 = tpu.memref_slice %arg2[%134, %c0_i32_111] : memref<64x128xf32, #tpu.memory_space<any>> -> memref<1x128xf32, #tpu.memory_space<any>>
        %c0_i32_112 = arith.constant 0 : i32
        %c0_i32_113 = arith.constant 0 : i32
        %136 = tpu.memref_slice %arg4[%129, %c0_i32_112, %c0_i32_113] : memref<2x8x128xf32, #tpu.memory_space<vmem>> -> memref<1x1x128xf32, #tpu.memory_space<vmem>>
        %137 = tpu.memref_squeeze %136 : memref<1x1x128xf32, #tpu.memory_space<vmem>> -> memref<1x128xf32, #tpu.memory_space<vmem>>
        %138 = tpu.memref_slice %arg5[%129, %c0_i32_110] : memref<2x8x!tpu.dma_semaphore, #tpu.memory_space<semaphore_mem>> -> memref<1x1x!tpu.dma_semaphore, #tpu.memory_space<semaphore_mem>>
        %139 = tpu.memref_squeeze %138 : memref<1x1x!tpu.dma_semaphore, #tpu.memory_space<semaphore_mem>> -> memref<!tpu.dma_semaphore, #tpu.memory_space<semaphore_mem>>
        tpu.enqueue_dma source(%135 : memref<1x128xf32, #tpu.memory_space<any>>) target(%137 : memref<1x128xf32, #tpu.memory_space<vmem>>) target_semaphore(%139 : memref<!tpu.dma_semaphore, #tpu.memory_space<semaphore_mem>>)
        %c8_i32_114 = arith.constant 8 : i32
        %140 = arith.muli %128, %c8_i32_114 : i32
        %141 = arith.addi %0, %140 : i32
        %c1_i32_115 = arith.constant 1 : i32
        %142 = arith.addi %141, %c1_i32_115 : i32
        %143 = arith.index_cast %142 : i32 to index
        %144 = memref.load %arg1[%143] : memref<16xi32, #tpu.memory_space<smem>>
        %c1_i32_116 = arith.constant 1 : i32
        %c0_i32_117 = arith.constant 0 : i32
        %145 = tpu.memref_slice %arg2[%144, %c0_i32_117] : memref<64x128xf32, #tpu.memory_space<any>> -> memref<1x128xf32, #tpu.memory_space<any>>
        %c1_i32_118 = arith.constant 1 : i32
        %c0_i32_119 = arith.constant 0 : i32
        %146 = tpu.memref_slice %arg4[%129, %c1_i32_118, %c0_i32_119] : memref<2x8x128xf32, #tpu.memory_space<vmem>> -> memref<1x1x128xf32, #tpu.memory_space<vmem>>
        %147 = tpu.memref_squeeze %146 : memref<1x1x128xf32, #tpu.memory_space<vmem>> -> memref<1x128xf32, #tpu.memory_space<vmem>>
        %148 = tpu.memref_slice %arg5[%129, %c1_i32_116] : memref<2x8x!tpu.dma_semaphore, #tpu.memory_space<semaphore_mem>> -> memref<1x1x!tpu.dma_semaphore, #tpu.memory_space<semaphore_mem>>
        %149 = tpu.memref_squeeze %148 : memref<1x1x!tpu.dma_semaphore, #tpu.memory_space<semaphore_mem>> -> memref<!tpu.dma_semaphore, #tpu.memory_space<semaphore_mem>>
        tpu.enqueue_dma source(%145 : memref<1x128xf32, #tpu.memory_space<any>>) target(%147 : memref<1x128xf32, #tpu.memory_space<vmem>>) target_semaphore(%149 : memref<!tpu.dma_semaphore, #tpu.memory_space<semaphore_mem>>)
        %c8_i32_120 = arith.constant 8 : i32
        %150 = arith.muli %128, %c8_i32_120 : i32
        %151 = arith.addi %0, %150 : i32
        %c2_i32_121 = arith.constant 2 : i32
        %152 = arith.addi %151, %c2_i32_121 : i32
        %153 = arith.index_cast %152 : i32 to index
        %154 = memref.load %arg1[%153] : memref<16xi32, #tpu.memory_space<smem>>
        %c2_i32_122 = arith.constant 2 : i32
        %c0_i32_123 = arith.constant 0 : i32
        %155 = tpu.memref_slice %arg2[%154, %c0_i32_123] : memref<64x128xf32, #tpu.memory_space<any>> -> memref<1x128xf32, #tpu.memory_space<any>>
        %c2_i32_124 = arith.constant 2 : i32
        %c0_i32_125 = arith.constant 0 : i32
        %156 = tpu.memref_slice %arg4[%129, %c2_i32_124, %c0_i32_125] : memref<2x8x128xf32, #tpu.memory_space<vmem>> -> memref<1x1x128xf32, #tpu.memory_space<vmem>>
        %157 = tpu.memref_squeeze %156 : memref<1x1x128xf32, #tpu.memory_space<vmem>> -> memref<1x128xf32, #tpu.memory_space<vmem>>
        %158 = tpu.memref_slice %arg5[%129, %c2_i32_122] : memref<2x8x!tpu.dma_semaphore, #tpu.memory_space<semaphore_mem>> -> memref<1x1x!tpu.dma_semaphore, #tpu.memory_space<semaphore_mem>>
        %159 = tpu.memref_squeeze %158 : memref<1x1x!tpu.dma_semaphore, #tpu.memory_space<semaphore_mem>> -> memref<!tpu.dma_semaphore, #tpu.memory_space<semaphore_mem>>
        tpu.enqueue_dma source(%155 : memref<1x128xf32, #tpu.memory_space<any>>) target(%157 : memref<1x128xf32, #tpu.memory_space<vmem>>) target_semaphore(%159 : memref<!tpu.dma_semaphore, #tpu.memory_space<semaphore_mem>>)
        %c8_i32_126 = arith.constant 8 : i32
        %160 = arith.muli %128, %c8_i32_126 : i32
        %161 = arith.addi %0, %160 : i32
        %c3_i32_127 = arith.constant 3 : i32
        %162 = arith.addi %161, %c3_i32_127 : i32
        %163 = arith.index_cast %162 : i32 to index
        %164 = memref.load %arg1[%163] : memref<16xi32, #tpu.memory_space<smem>>
        %c3_i32_128 = arith.constant 3 : i32
        %c0_i32_129 = arith.constant 0 : i32
        %165 = tpu.memref_slice %arg2[%164, %c0_i32_129] : memref<64x128xf32, #tpu.memory_space<any>> -> memref<1x128xf32, #tpu.memory_space<any>>
        %c3_i32_130 = arith.constant 3 : i32
        %c0_i32_131 = arith.constant 0 : i32
        %166 = tpu.memref_slice %arg4[%129, %c3_i32_130, %c0_i32_131] : memref<2x8x128xf32, #tpu.memory_space<vmem>> -> memref<1x1x128xf32, #tpu.memory_space<vmem>>
        %167 = tpu.memref_squeeze %166 : memref<1x1x128xf32, #tpu.memory_space<vmem>> -> memref<1x128xf32, #tpu.memory_space<vmem>>
        %168 = tpu.memref_slice %arg5[%129, %c3_i32_128] : memref<2x8x!tpu.dma_semaphore, #tpu.memory_space<semaphore_mem>> -> memref<1x1x!tpu.dma_semaphore, #tpu.memory_space<semaphore_mem>>
        %169 = tpu.memref_squeeze %168 : memref<1x1x!tpu.dma_semaphore, #tpu.memory_space<semaphore_mem>> -> memref<!tpu.dma_semaphore, #tpu.memory_space<semaphore_mem>>
        tpu.enqueue_dma source(%165 : memref<1x128xf32, #tpu.memory_space<any>>) target(%167 : memref<1x128xf32, #tpu.memory_space<vmem>>) target_semaphore(%169 : memref<!tpu.dma_semaphore, #tpu.memory_space<semaphore_mem>>)
        %c8_i32_132 = arith.constant 8 : i32
        %170 = arith.muli %128, %c8_i32_132 : i32
        %171 = arith.addi %0, %170 : i32
        %c4_i32_133 = arith.constant 4 : i32
        %172 = arith.addi %171, %c4_i32_133 : i32
        %173 = arith.index_cast %172 : i32 to index
        %174 = memref.load %arg1[%173] : memref<16xi32, #tpu.memory_space<smem>>
        %c4_i32_134 = arith.constant 4 : i32
        %c0_i32_135 = arith.constant 0 : i32
        %175 = tpu.memref_slice %arg2[%174, %c0_i32_135] : memref<64x128xf32, #tpu.memory_space<any>> -> memref<1x128xf32, #tpu.memory_space<any>>
        %c4_i32_136 = arith.constant 4 : i32
        %c0_i32_137 = arith.constant 0 : i32
        %176 = tpu.memref_slice %arg4[%129, %c4_i32_136, %c0_i32_137] : memref<2x8x128xf32, #tpu.memory_space<vmem>> -> memref<1x1x128xf32, #tpu.memory_space<vmem>>
        %177 = tpu.memref_squeeze %176 : memref<1x1x128xf32, #tpu.memory_space<vmem>> -> memref<1x128xf32, #tpu.memory_space<vmem>>
        %178 = tpu.memref_slice %arg5[%129, %c4_i32_134] : memref<2x8x!tpu.dma_semaphore, #tpu.memory_space<semaphore_mem>> -> memref<1x1x!tpu.dma_semaphore, #tpu.memory_space<semaphore_mem>>
        %179 = tpu.memref_squeeze %178 : memref<1x1x!tpu.dma_semaphore, #tpu.memory_space<semaphore_mem>> -> memref<!tpu.dma_semaphore, #tpu.memory_space<semaphore_mem>>
        tpu.enqueue_dma source(%175 : memref<1x128xf32, #tpu.memory_space<any>>) target(%177 : memref<1x128xf32, #tpu.memory_space<vmem>>) target_semaphore(%179 : memref<!tpu.dma_semaphore, #tpu.memory_space<semaphore_mem>>)
        %c8_i32_138 = arith.constant 8 : i32
        %180 = arith.muli %128, %c8_i32_138 : i32
        %181 = arith.addi %0, %180 : i32
        %c5_i32_139 = arith.constant 5 : i32
        %182 = arith.addi %181, %c5_i32_139 : i32
        %183 = arith.index_cast %182 : i32 to index
        %184 = memref.load %arg1[%183] : memref<16xi32, #tpu.memory_space<smem>>
        %c5_i32_140 = arith.constant 5 : i32
        %c0_i32_141 = arith.constant 0 : i32
        %185 = tpu.memref_slice %arg2[%184, %c0_i32_141] : memref<64x128xf32, #tpu.memory_space<any>> -> memref<1x128xf32, #tpu.memory_space<any>>
        %c5_i32_142 = arith.constant 5 : i32
        %c0_i32_143 = arith.constant 0 : i32
        %186 = tpu.memref_slice %arg4[%129, %c5_i32_142, %c0_i32_143] : memref<2x8x128xf32, #tpu.memory_space<vmem>> -> memref<1x1x128xf32, #tpu.memory_space<vmem>>
        %187 = tpu.memref_squeeze %186 : memref<1x1x128xf32, #tpu.memory_space<vmem>> -> memref<1x128xf32, #tpu.memory_space<vmem>>
        %188 = tpu.memref_slice %arg5[%129, %c5_i32_140] : memref<2x8x!tpu.dma_semaphore, #tpu.memory_space<semaphore_mem>> -> memref<1x1x!tpu.dma_semaphore, #tpu.memory_space<semaphore_mem>>
        %189 = tpu.memref_squeeze %188 : memref<1x1x!tpu.dma_semaphore, #tpu.memory_space<semaphore_mem>> -> memref<!tpu.dma_semaphore, #tpu.memory_space<semaphore_mem>>
        tpu.enqueue_dma source(%185 : memref<1x128xf32, #tpu.memory_space<any>>) target(%187 : memref<1x128xf32, #tpu.memory_space<vmem>>) target_semaphore(%189 : memref<!tpu.dma_semaphore, #tpu.memory_space<semaphore_mem>>)
        %c8_i32_144 = arith.constant 8 : i32
        %190 = arith.muli %128, %c8_i32_144 : i32
        %191 = arith.addi %0, %190 : i32
        %c6_i32_145 = arith.constant 6 : i32
        %192 = arith.addi %191, %c6_i32_145 : i32
        %193 = arith.index_cast %192 : i32 to index
        %194 = memref.load %arg1[%193] : memref<16xi32, #tpu.memory_space<smem>>
        %c6_i32_146 = arith.constant 6 : i32
        %c0_i32_147 = arith.constant 0 : i32
        %195 = tpu.memref_slice %arg2[%194, %c0_i32_147] : memref<64x128xf32, #tpu.memory_space<any>> -> memref<1x128xf32, #tpu.memory_space<any>>
        %c6_i32_148 = arith.constant 6 : i32
        %c0_i32_149 = arith.constant 0 : i32
        %196 = tpu.memref_slice %arg4[%129, %c6_i32_148, %c0_i32_149] : memref<2x8x128xf32, #tpu.memory_space<vmem>> -> memref<1x1x128xf32, #tpu.memory_space<vmem>>
        %197 = tpu.memref_squeeze %196 : memref<1x1x128xf32, #tpu.memory_space<vmem>> -> memref<1x128xf32, #tpu.memory_space<vmem>>
        %198 = tpu.memref_slice %arg5[%129, %c6_i32_146] : memref<2x8x!tpu.dma_semaphore, #tpu.memory_space<semaphore_mem>> -> memref<1x1x!tpu.dma_semaphore, #tpu.memory_space<semaphore_mem>>
        %199 = tpu.memref_squeeze %198 : memref<1x1x!tpu.dma_semaphore, #tpu.memory_space<semaphore_mem>> -> memref<!tpu.dma_semaphore, #tpu.memory_space<semaphore_mem>>
        tpu.enqueue_dma source(%195 : memref<1x128xf32, #tpu.memory_space<any>>) target(%197 : memref<1x128xf32, #tpu.memory_space<vmem>>) target_semaphore(%199 : memref<!tpu.dma_semaphore, #tpu.memory_space<semaphore_mem>>)
        %c8_i32_150 = arith.constant 8 : i32
        %200 = arith.muli %128, %c8_i32_150 : i32
        %201 = arith.addi %0, %200 : i32
        %c7_i32_151 = arith.constant 7 : i32
        %202 = arith.addi %201, %c7_i32_151 : i32
        %203 = arith.index_cast %202 : i32 to index
        %204 = memref.load %arg1[%203] : memref<16xi32, #tpu.memory_space<smem>>
        %c7_i32_152 = arith.constant 7 : i32
        %c0_i32_153 = arith.constant 0 : i32
        %205 = tpu.memref_slice %arg2[%204, %c0_i32_153] : memref<64x128xf32, #tpu.memory_space<any>> -> memref<1x128xf32, #tpu.memory_space<any>>
        %c7_i32_154 = arith.constant 7 : i32
        %c0_i32_155 = arith.constant 0 : i32
        %206 = tpu.memref_slice %arg4[%129, %c7_i32_154, %c0_i32_155] : memref<2x8x128xf32, #tpu.memory_space<vmem>> -> memref<1x1x128xf32, #tpu.memory_space<vmem>>
        %207 = tpu.memref_squeeze %206 : memref<1x1x128xf32, #tpu.memory_space<vmem>> -> memref<1x128xf32, #tpu.memory_space<vmem>>
        %208 = tpu.memref_slice %arg5[%129, %c7_i32_152] : memref<2x8x!tpu.dma_semaphore, #tpu.memory_space<semaphore_mem>> -> memref<1x1x!tpu.dma_semaphore, #tpu.memory_space<semaphore_mem>>
        %209 = tpu.memref_squeeze %208 : memref<1x1x!tpu.dma_semaphore, #tpu.memory_space<semaphore_mem>> -> memref<!tpu.dma_semaphore, #tpu.memory_space<semaphore_mem>>
        tpu.enqueue_dma source(%205 : memref<1x128xf32, #tpu.memory_space<any>>) target(%207 : memref<1x128xf32, #tpu.memory_space<vmem>>) target_semaphore(%209 : memref<!tpu.dma_semaphore, #tpu.memory_space<semaphore_mem>>)
      } else {
      }
      %119 = arith.index_cast %74 : i32 to index
      %c0 = arith.constant 0 : index
      %c0_104 = arith.constant 0 : index
      %120 = vector.load %arg4[%119, %c0, %c0_104] : memref<2x8x128xf32, #tpu.memory_space<vmem>>, vector<1x8x128xf32>
      %121 = vector.shape_cast %120 : vector<1x8x128xf32> to vector<8x128xf32>
      %cst = arith.constant 11.3137083 : f32
      %122 = vector.broadcast %cst : f32 to vector<8x128xf32>
      %123 = arith.mulf %121, %122 : vector<8x128xf32>
      %c8_i32 = arith.constant 8 : i32
      %124 = arith.muli %arg6, %c8_i32 : i32
      %125 = tpu.assume_multiple %124, 8 : i32
      %126 = arith.index_cast %125 : i32 to index
      %c0_105 = arith.constant 0 : index
      %127 = vector.load %arg3[%126, %c0_105] : memref<16x128xf32, #tpu.memory_space<vmem>>, vector<8x128xf32>
      tpu.vector_store %arg3[%126, %c0_105], %123 {strides = array<i32>} : memref<16x128xf32, #tpu.memory_space<vmem>>, vector<8x128xf32>,
    }
    %c2_i32_59 = arith.constant 2 : i32
    return
  }
  func.func @transform_1(%arg0: i32, %arg1: memref<16xi32, #tpu.memory_space<smem>>) -> (i32, i32) {
    %c0_i32 = arith.constant 0 : i32
    %c0_i32_0 = arith.constant 0 : i32
    return %arg0, %c0_i32 : i32, i32
  }
}

</mosaic_0001>

<llo_original>
// kernel: tpu_custom_call.1
$region0: #{tpu_custom_call.1}
  #allocation0 [shape = 'u32[]', space=smem, size = 0x4, offset = 0x4, fixed_abs, tag = 'smem constant byte address 0x4 - core index']
  #allocation1 [shape = 'u32[72,128]{1,0:T(1,128)}', space=vmem, size = 0x9000, scoped, tag = 'internal scratch']
  %s0 = inlined_call_operand.vmem [shape: s32[16,1], index: 0, kind: input, shape index: {}]
  %s1 = inlined_call_operand.hbm [shape: f32[64,128], index: 1, kind: input, shape index: {}]
  %s2 = inlined_call_operand.hbm [shape: f32[16,128], index: 2, kind: output, shape index: {}]
  %s3 = sld [smem:[#allocation0]]
  $region22: #{tpu_custom_call.1} parent=0
    _
  %s5 = ssub.s32 1, %s3
  %s6 = scalar_select 0, %s5, %s3
  $region1: #{tpu_custom_call.1} parent=0
    #allocation2 [shape = 'u8[32768]{0}', space=vmem, size = 0x8000, scoped, tag = 'input window, operand 1, single buffered']
    #allocation3 [shape = 's32[1]{0}', space=sflag, size = 0x4, scoped, tag = 'scoped memory for tpu_custom_call.1']
    #allocation4 [shape = 's32[1]{0}', space=sflag, size = 0x4, scoped, tag = 'scoped memory for tpu_custom_call.1']
    #allocation5 [shape = 'u8[8192]{0}', space=vmem, size = 0x2000, scoped, tag = 'output window, operand 0, single buffered']
    %7 = vsyncpa [#allocation3], 0
    %8 = vsyncpa [#allocation4], 0
    // Predicated region
    $region2: #{tpu_custom_call.1} parent=1 // pred_check
      _
    $region3: #{tpu_custom_call.1} parent=1 // pred_check_branch
      %10 = sbr.rel (0) target = $region5
    $region4: #{tpu_custom_call.1} parent=1 // pred_region
      _
    $region5: #{tpu_custom_call.1} parent=1 // pred_fallthru
      _
    // Predicated region
    $region6: #{tpu_custom_call.1} parent=1 // pred_check
      _
    $region7: #{tpu_custom_call.1} parent=1 // pred_check_branch
      %12 = sbr.rel (0) target = $region9
    $region8: #{tpu_custom_call.1} parent=1 // pred_region
      %14 = vsyncadd [#allocation3], 0
      %s15 = sshll.u32 %s1, 4
      %s16 = int_to_ptr.hbm [resolvable:$true] %s15
      %s17 = sshll.u32 [#allocation2], 4
      %s18 = int_to_ptr.vmem [resolvable:$true] %s17
      %23 = dma.hbm_to_vmem [thread:$0]  %s16, 1024, %s18, [#allocation3], 128, 128, 8
    $region9: #{tpu_custom_call.1} parent=1 // pred_fallthru
      _
    // Predicated region
    $region10: #{tpu_custom_call.1} parent=1 // pred_check
      _
    $region11: #{tpu_custom_call.1} parent=1 // pred_check_branch
      %25 = sbr.rel (0) target = $region13
    $region12: #{tpu_custom_call.1} parent=1 // pred_region
      %27 = dma.done [#allocation3], 1024
    $region13: #{tpu_custom_call.1} parent=1 // pred_fallthru
      _
    %v28 = vld [vmem:[%s0] sm:$0xff]
    %v29 = vld [vmem:[%s0 + $0x8] sm:$0xff]
    %v30 = vld [vmem:[#allocation2] sm:$0xff]
    %v31 = vld [vmem:[#allocation2 + $0x8] sm:$0xff]
    %v32 = vld [vmem:[#allocation2 + $0x10] sm:$0xff]
    %v33 = vld [vmem:[#allocation2 + $0x18] sm:$0xff]
    %v34 = vld [vmem:[#allocation2 + $0x20] sm:$0xff]
    %v35 = vld [vmem:[#allocation2 + $0x28] sm:$0xff]
    %v36 = vld [vmem:[#allocation2 + $0x30] sm:$0xff]
    %v37 = vld [vmem:[#allocation2 + $0x38] sm:$0xff]
    %v38 = vlaneseq
    %v39 = vand.u32 %v38, 127
    %40 = vset.pattern.permute.xlu0 0
    %41 = vperm.xlu0 %40, %v28
    %v42 = vpop.permute.xlu0 %41
    %43 = vset.pattern.permute.xlu0 0
    %44 = vperm.xlu0 %43, %v29
    %v45 = vpop.permute.xlu0 %44
    %vm46 = vcmp.eq.s32.totalorder %v39, %v42
    %vm47 = vcmp.eq.s32.totalorder %v39, %v45
    %v48 = vsel %vm46, 1, 0
    %v49 = vsel %vm47, 1, 0
    %v50 = vcvt.s32.f32 %v48
    %v51 = vcvt.s32.f32 %v49
    %vm52 = vcmask 523264
    %v54 = vsel %vm52, %v50, 0
    %v57 = vsel %vm52, %v51, 0
    %59 = vmatpush.msra.mxu0 0.0
    %60 = vmatpush.msra.mxu0 0.0
    %61 = vmatpush.msra.mxu0 0.0
    %62 = vmatpush.msra.mxu0 0.0
    %63 = vmatpush.msra.mxu0 0.0
    %64 = vmatpush.msra.mxu0 0.0
    %65 = vmatpush.msra.mxu0 0.0
    %66 = vmatpush.msra.mxu0 0.0
    %67 = vmatpush.msra.mxu0 %v37
    %68 = vmatpush.msra.mxu0 %v36
    %69 = vmatpush.msra.mxu0 %v35
    %70 = vmatpush.msra.mxu0 %v34
    %71 = vmatpush.msra.mxu0 %v33
    %72 = vmatpush.msra.mxu0 %v32
    %73 = vmatpush.msra.mxu0 %v31
    %74 = vmatpush.msra.mxu0 %v30
    %75 = vmatmul.f32.gmra.mxu0 %v54
    %v76 = vpop.f32.mrf.mxu0
    %v77 = vadd.f32 0.0, %v76
    %78 = vmatmul.f32.gmra.mxu0 %v57
    %v79 = vpop.f32.mrf.mxu0
    %v80 = vadd.f32 0.0, %v79
    %81 = vdwg.mxu0
    %v82 = vmul.f32 %v77, 11.313708
    %v83 = vmul.f32 %v80, 11.313708
    %84 = vst [vmem:[#allocation5] sm:$0xff] %v82
    %85 = vst [vmem:[#allocation5 + $0x8] sm:$0xff] %v83
    // Predicated region
    $region14: #{tpu_custom_call.1} parent=1 // pred_check
      _
    $region15: #{tpu_custom_call.1} parent=1 // pred_check_branch
      %87 = sbr.rel (0) target = $region17
    $region16: #{tpu_custom_call.1} parent=1 // pred_region
      %89 = vsyncadd [#allocation4], 0
      %s90 = sshll.u32 [#allocation5], 4
      %s91 = int_to_ptr.vmem [resolvable:$true] %s90
      %s92 = sshll.u32 %s2, 4
      %s93 = int_to_ptr.hbm [resolvable:$true] %s92
      %98 = dma.vmem_to_hbm [thread:$0]  %s91, 256, %s93, [#allocation4], 128, 128, 8
    $region17: #{tpu_custom_call.1} parent=1 // pred_fallthru
      _
    // Predicated region
    $region18: #{tpu_custom_call.1} parent=1 // pred_check
      _
    $region19: #{tpu_custom_call.1} parent=1 // pred_check_branch
      %100 = sbr.rel (0) target = $region21
    $region20: #{tpu_custom_call.1} parent=1 // pred_region
      %102 = dma.done [#allocation4], 256
    $region21: #{tpu_custom_call.1} parent=1 // pred_fallthru
      _
    %103 = vsyncpa [#allocation3], 1
    %104 = vsyncpa [#allocation4], 1

// kernel: tpu_custom_call.1
$region0: #{tpu_custom_call.1}
  #allocation0 [shape = 'u32[]', space=smem, size = 0x4, offset = 0x4, fixed_abs, tag = 'smem constant byte address 0x4 - core index']
  #allocation1 [shape = 'u32[72,128]{1,0:T(1,128)}', space=vmem, size = 0x9000, scoped, tag = 'internal scratch']
  %s0 = inlined_call_operand.vmem [shape: s32[16,1], index: 0, kind: input, shape index: {}]
  %s1 = inlined_call_operand.hbm [shape: f32[64,128], index: 1, kind: input, shape index: {}]
  %s2 = inlined_call_operand.hbm [shape: f32[16,128], index: 2, kind: output, shape index: {}]
  %s3 = sld [smem:[#allocation0]]
  $region22: #{tpu_custom_call.1} parent=0
    _
  %s5 = ssub.s32 1, %s3
  %s6 = scalar_select 0, %s5, %s3
  $region1: #{tpu_custom_call.1} parent=0
    #allocation2 [shape = 'u8[32768]{0}', space=vmem, size = 0x8000, scoped, tag = 'input window, operand 1, single buffered']
    #allocation3 [shape = 's32[1]{0}', space=sflag, size = 0x4, scoped, tag = 'scoped memory for tpu_custom_call.1']
    #allocation4 [shape = 's32[1]{0}', space=sflag, size = 0x4, scoped, tag = 'scoped memory for tpu_custom_call.1']
    #allocation5 [shape = 'u8[8192]{0}', space=vmem, size = 0x2000, scoped, tag = 'output window, operand 0, single buffered']
    %7 = vsyncpa [#allocation3], 0
    %8 = vsyncpa [#allocation4], 0
    // Predicated region
    $region2: #{tpu_custom_call.1} parent=1 // pred_check
      _
    $region3: #{tpu_custom_call.1} parent=1 // pred_check_branch
      %10 = sbr.rel (0) target = $region5
    $region4: #{tpu_custom_call.1} parent=1 // pred_region
      _
    $region5: #{tpu_custom_call.1} parent=1 // pred_fallthru
      _
    // Predicated region
    $region6: #{tpu_custom_call.1} parent=1 // pred_check
      _
    $region7: #{tpu_custom_call.1} parent=1 // pred_check_branch
      %12 = sbr.rel (0) target = $region9
    $region8: #{tpu_custom_call.1} parent=1 // pred_region
      %14 = vsyncadd [#allocation3], 0
      %s15 = sshll.u32 %s1, 4
      %s16 = int_to_ptr.hbm [resolvable:$true] %s15
      %s17 = sshll.u32 [#allocation2], 4
      %s18 = int_to_ptr.vmem [resolvable:$true] %s17
      %23 = dma.hbm_to_vmem [thread:$0]  %s16, 1024, %s18, [#allocation3], 128, 128, 8
    $region9: #{tpu_custom_call.1} parent=1 // pred_fallthru
      _
    // Predicated region
    $region10: #{tpu_custom_call.1} parent=1 // pred_check
      _
    $region11: #{tpu_custom_call.1} parent=1 // pred_check_branch
      %25 = sbr.rel (0) target = $region13
    $region12: #{tpu_custom_call.1} parent=1 // pred_region
      %27 = dma.done [#allocation3], 1024
    $region13: #{tpu_custom_call.1} parent=1 // pred_fallthru
      _
    %v28 = vld [vmem:[%s0] sm:$0xff]
    %v29 = vld [vmem:[%s0 + $0x8] sm:$0xff]
    %v30 = vld [vmem:[#allocation2] sm:$0xff]
    %v31 = vld [vmem:[#allocation2 + $0x8] sm:$0xff]
    %v32 = vld [vmem:[#allocation2 + $0x10] sm:$0xff]
    %v33 = vld [vmem:[#allocation2 + $0x18] sm:$0xff]
    %v34 = vld [vmem:[#allocation2 + $0x20] sm:$0xff]
    %v35 = vld [vmem:[#allocation2 + $0x28] sm:$0xff]
    %v36 = vld [vmem:[#allocation2 + $0x30] sm:$0xff]
    %v37 = vld [vmem:[#allocation2 + $0x38] sm:$0xff]
    %v38 = vlaneseq
    %v39 = vand.u32 %v38, 127
    %40 = vset.pattern.permute.xlu0 0
    %41 = vperm.xlu0 %40, %v28
    %v42 = vpop.permute.xlu0 %41
    %43 = vset.pattern.permute.xlu0 0
    %44 = vperm.xlu0 %43, %v29
    %v45 = vpop.permute.xlu0 %44
    %vm46 = vcmp.eq.s32.totalorder %v39, %v42
    %vm47 = vcmp.eq.s32.totalorder %v39, %v45
    %v48 = vsel %vm46, 1, 0
    %v49 = vsel %vm47, 1, 0
    %v50 = vcvt.s32.f32 %v48
    %v51 = vcvt.s32.f32 %v49
    %vm52 = vcmask 523264
    %v54 = vsel %vm52, %v50, 0
    %v57 = vsel %vm52, %v51, 0
    %59 = vmatpush.msra.mxu0 0.0
    %60 = vmatpush.msra.mxu0 0.0
    %61 = vmatpush.msra.mxu0 0.0
    %62 = vmatpush.msra.mxu0 0.0
    %63 = vmatpush.msra.mxu0 0.0
    %64 = vmatpush.msra.mxu0 0.0
    %65 = vmatpush.msra.mxu0 0.0
    %66 = vmatpush.msra.mxu0 0.0
    %67 = vmatpush.msra.mxu0 %v37
    %68 = vmatpush.msra.mxu0 %v36
    %69 = vmatpush.msra.mxu0 %v35
    %70 = vmatpush.msra.mxu0 %v34
    %71 = vmatpush.msra.mxu0 %v33
    %72 = vmatpush.msra.mxu0 %v32
    %73 = vmatpush.msra.mxu0 %v31
    %74 = vmatpush.msra.mxu0 %v30
    %75 = vmatmul.f32.gmra.mxu0 %v54
    %v76 = vpop.f32.mrf.mxu0
    %v77 = vadd.f32 0.0, %v76
    %78 = vmatmul.f32.gmra.mxu0 %v57
    %v79 = vpop.f32.mrf.mxu0
    %v80 = vadd.f32 0.0, %v79
    %81 = vdwg.mxu0
    %v82 = vmul.f32 %v77, 11.313708
    %v83 = vmul.f32 %v80, 11.313708
    %84 = vst [vmem:[#allocation5] sm:$0xff] %v82
    %85 = vst [vmem:[#allocation5 + $0x8] sm:$0xff] %v83
    // Predicated region
    $region14: #{tpu_custom_call.1} parent=1 // pred_check
      _
    $region15: #{tpu_custom_call.1} parent=1 // pred_check_branch
      %87 = sbr.rel (0) target = $region17
    $region16: #{tpu_custom_call.1} parent=1 // pred_region
      %89 = vsyncadd [#allocation4], 0
      %s90 = sshll.u32 [#allocation5], 4
      %s91 = int_to_ptr.vmem [resolvable:$true] %s90
      %s92 = sshll.u32 %s2, 4
      %s93 = int_to_ptr.hbm [resolvable:$true] %s92
      %98 = dma.vmem_to_hbm [thread:$0]  %s91, 256, %s93, [#allocation4], 128, 128, 8
    $region17: #{tpu_custom_call.1} parent=1 // pred_fallthru
      _
    // Predicated region
    $region18: #{tpu_custom_call.1} parent=1 // pred_check
      _
    $region19: #{tpu_custom_call.1} parent=1 // pred_check_branch
      %100 = sbr.rel (0) target = $region21
    $region20: #{tpu_custom_call.1} parent=1 // pred_region
      %102 = dma.done [#allocation4], 256
    $region21: #{tpu_custom_call.1} parent=1 // pred_fallthru
      _
    %103 = vsyncpa [#allocation3], 1
    %104 = vsyncpa [#allocation4], 1

// kernel: tpu_custom_call.1
$region0: #{tpu_custom_call.1}
  #allocation0 [shape = 'u32[]', space=smem, size = 0x4, offset = 0x4, fixed_abs, tag = 'smem constant byte address 0x4 - core index']
  #allocation1 [shape = 'u32[72,128]{1,0:T(1,128)}', space=vmem, size = 0x9000, scoped, tag = 'internal scratch']
  #allocation2 [shape = 'f32[2,8,128]{2,1,0:T(8,128)}', space=vmem, size = 0x2000, scoped, tag = 'scratch operand']
  #allocation3 [shape = 's32[16]{0}', space=sflag, size = 0x40, scoped, tag = 'scratch operand']
  #allocation4 [shape = 's32[1]{0}', space=sflag, size = 0x4, scoped, tag = 'scoped memory for tpu_custom_call.1']
  #allocation5 [shape = 'u8[512]{0}', space=smem, size = 0x200, scoped, tag = 'prefetched SMEM operand 0']
  #allocation8 [shape = 's32[]', space=sflag, size = 0x4, offset = 0, fixed_abs, tag = 'sflag constant byte address 0x0 - dummy sync flag']
  #allocation9 [shape = 's32[]', space=sflag, size = 0x4, offset = 0, fixed_abs, tag = 'sflag constant byte address 0x0 - dummy sync flag']
  #allocation10 [shape = 'u32[]', space=smem, size = 0x4, offset = 0x44, fixed_abs, tag = 'smem constant byte address 0x44 - assertion arg 0']
  #allocation11 [shape = 'u32[]', space=smem, size = 0x4, offset = 0x48, fixed_abs, tag = 'smem constant byte address 0x48 - assertion arg 1']
  #allocation12 [shape = 's32[]', space=sflag, size = 0x4, offset = 0, fixed_abs, tag = 'sflag constant byte address 0x0 - dummy sync flag']
  #allocation13 [shape = 's32[]', space=sflag, size = 0x4, offset = 0, fixed_abs, tag = 'sflag constant byte address 0x0 - dummy sync flag']
  #allocation14 [shape = 's32[]', space=sflag, size = 0x4, offset = 0, fixed_abs, tag = 'sflag constant byte address 0x0 - dummy sync flag']
  #allocation15 [shape = 's32[]', space=sflag, size = 0x4, offset = 0, fixed_abs, tag = 'sflag constant byte address 0x0 - dummy sync flag']
  #allocation16 [shape = 's32[]', space=sflag, size = 0x4, offset = 0, fixed_abs, tag = 'sflag constant byte address 0x0 - dummy sync flag']
  #allocation17 [shape = 's32[]', space=sflag, size = 0x4, offset = 0, fixed_abs, tag = 'sflag constant byte address 0x0 - dummy sync flag']
  #allocation18 [shape = 's32[]', space=sflag, size = 0x4, offset = 0, fixed_abs, tag = 'sflag constant byte address 0x0 - dummy sync flag']
  #allocation19 [shape = 's32[]', space=sflag, size = 0x4, offset = 0, fixed_abs, tag = 'sflag constant byte address 0x0 - dummy sync flag']
  #allocation20 [shape = 's32[]', space=sflag, size = 0x4, offset = 0, fixed_abs, tag = 'sflag constant byte address 0x0 - dummy sync flag']
  #allocation21 [shape = 's32[]', space=sflag, size = 0x4, offset = 0, fixed_abs, tag = 'sflag constant byte address 0x0 - dummy sync flag']
  #allocation22 [shape = 's32[]', space=sflag, size = 0x4, offset = 0, fixed_abs, tag = 'sflag constant byte address 0x0 - dummy sync flag']
  #allocation23 [shape = 's32[]', space=sflag, size = 0x4, offset = 0, fixed_abs, tag = 'sflag constant byte address 0x0 - dummy sync flag']
  #allocation24 [shape = 's32[]', space=sflag, size = 0x4, offset = 0, fixed_abs, tag = 'sflag constant byte address 0x0 - dummy sync flag']
  #allocation25 [shape = 's32[]', space=sflag, size = 0x4, offset = 0, fixed_abs, tag = 'sflag constant byte address 0x0 - dummy sync flag']
  #allocation26 [shape = 's32[]', space=sflag, size = 0x4, offset = 0, fixed_abs, tag = 'sflag constant byte address 0x0 - dummy sync flag']
  #allocation27 [shape = 's32[]', space=sflag, size = 0x4, offset = 0, fixed_abs, tag = 'sflag constant byte address 0x0 - dummy sync flag']
  #allocation28 [shape = 's32[]', space=sflag, size = 0x4, offset = 0, fixed_abs, tag = 'sflag constant byte address 0x0 - dummy sync flag']
  #allocation29 [shape = 's32[]', space=sflag, size = 0x4, offset = 0, fixed_abs, tag = 'sflag constant byte address 0x0 - dummy sync flag']
  #allocation30 [shape = 's32[]', space=sflag, size = 0x4, offset = 0, fixed_abs, tag = 'sflag constant byte address 0x0 - dummy sync flag']
  #allocation31 [shape = 's32[]', space=sflag, size = 0x4, offset = 0, fixed_abs, tag = 'sflag constant byte address 0x0 - dummy sync flag']
  #allocation32 [shape = 's32[]', space=sflag, size = 0x4, offset = 0, fixed_abs, tag = 'sflag constant byte address 0x0 - dummy sync flag']
  #allocation33 [shape = 's32[]', space=sflag, size = 0x4, offset = 0, fixed_abs, tag = 'sflag constant byte address 0x0 - dummy sync flag']
  #allocation34 [shape = 's32[]', space=sflag, size = 0x4, offset = 0, fixed_abs, tag = 'sflag constant byte address 0x0 - dummy sync flag']
  #allocation35 [shape = 's32[]', space=sflag, size = 0x4, offset = 0, fixed_abs, tag = 'sflag constant byte address 0x0 - dummy sync flag']
  #allocation36 [shape = 's32[]', space=sflag, size = 0x4, offset = 0, fixed_abs, tag = 'sflag constant byte address 0x0 - dummy sync flag']
  #allocation37 [shape = 's32[]', space=sflag, size = 0x4, offset = 0, fixed_abs, tag = 'sflag constant byte address 0x0 - dummy sync flag']
  #allocation38 [shape = 's32[]', space=sflag, size = 0x4, offset = 0, fixed_abs, tag = 'sflag constant byte address 0x0 - dummy sync flag']
  #allocation39 [shape = 's32[]', space=sflag, size = 0x4, offset = 0, fixed_abs, tag = 'sflag constant byte address 0x0 - dummy sync flag']
  #allocation40 [shape = 's32[]', space=sflag, size = 0x4, offset = 0, fixed_abs, tag = 'sflag constant byte address 0x0 - dummy sync flag']
  #allocation41 [shape = 's32[]', space=sflag, size = 0x4, offset = 0, fixed_abs, tag = 'sflag constant byte address 0x0 - dummy sync flag']
  %s0 = inlined_call_operand.hbm [shape: s32[16], index: 0, kind: input, shape index: {}]
  %s1 = inlined_call_operand.hbm [shape: f32[64,128], index: 1, kind: input, shape index: {}]
  %s2 = inlined_call_operand.hbm [shape: f32[16,128], index: 2, kind: output, shape index: {}]
  %s3 = sld [smem:[#allocation0]]
  $region85: #{tpu_custom_call.1} parent=0
    _
  %s5 = ssub.s32 1, %s3
  %s6 = scalar_select 0, %s5, %s3
  %s8 = sshll.u32 %s0, 4
  %s9 = int_to_ptr.hbm [resolvable:$true] %s8
  %11 = dma.hbm_to_smem %s9, 16, [#allocation5], [#allocation4]
  %13 = dma.done [#allocation4], 16
  %14 = sfence
  $region1: #{tpu_custom_call.1} parent=0
    #allocation6 [shape = 'u8[8192]{0}', space=vmem, size = 0x2000, scoped, tag = 'output window, operand 0, single buffered']
    #allocation7 [shape = 's32[1]{0}', space=sflag, size = 0x4, scoped, tag = 'scoped memory for tpu_custom_call.1']
    %15 = vsyncpa [#allocation7], 0
    %s16 = smul.u32 0, 16
    %s17 = sld [smem:[#allocation5 + %s16]]
    %s18 = scalar_lea.hbm %s1, %s17
    // Predicated region
    $region2: #{tpu_custom_call.1} parent=1 // pred_check
      _
    $region3: #{tpu_custom_call.1} parent=1 // pred_check_branch
      %20 = sbr.rel target = $region5
    $region4: #{tpu_custom_call.1} parent=1 // pred_region
      %21 = sst [smem:[#allocation10]] [#allocation9]
      %22 = sst [smem:[#allocation11]] [#allocation8]
    $region5: #{tpu_custom_call.1} parent=1 // pred_fallthru
      _
    %24 = shalt.err (0)
    %s26 = sshll.u32 %s18, 4
    %s27 = int_to_ptr.hbm [resolvable:$true] %s26
    %s28 = sshll.u32 [#allocation2], 4
    %s29 = int_to_ptr.vmem [resolvable:$true] %s28
    %31 = dma.hbm_to_vmem [thread:$0]  %s27, 16, %s29, [#allocation3]
    %s32 = sadd.s32 %s16, 1
    %s33 = sld [smem:[#allocation5 + %s32]]
    %s34 = scalar_lea.hbm %s1, %s33
    %s35 = scalar_lea.vmem [#allocation2], 1
    %s36 = scalar_lea.sflag [#allocation3], 1
    // Predicated region
    $region6: #{tpu_custom_call.1} parent=1 // pred_check
      _
    $region7: #{tpu_custom_call.1} parent=1 // pred_check_branch
      %38 = sbr.rel target = $region9
    $region8: #{tpu_custom_call.1} parent=1 // pred_region
      %39 = sst [smem:[#allocation10]] [#allocation13]
      %40 = sst [smem:[#allocation11]] [#allocation12]
    $region9: #{tpu_custom_call.1} parent=1 // pred_fallthru
      _
    %42 = shalt.err (0)
    %s44 = sshll.u32 %s34, 4
    %s45 = int_to_ptr.hbm [resolvable:$true] %s44
    %s46 = sshll.u32 %s35, 4
    %s47 = int_to_ptr.vmem [resolvable:$true] %s46
    %49 = dma.hbm_to_vmem [thread:$0]  %s45, 16, %s47, %s36
    %s50 = sadd.s32 %s16, 2
    %s51 = sld [smem:[#allocation5 + %s50]]
    %s52 = scalar_lea.hbm %s1, %s51
    %s53 = scalar_lea.vmem [#allocation2], 2
    %s54 = scalar_lea.sflag [#allocation3], 2
    // Predicated region
    $region10: #{tpu_custom_call.1} parent=1 // pred_check
      _
    $region11: #{tpu_custom_call.1} parent=1 // pred_check_branch
      %56 = sbr.rel target = $region13
    $region12: #{tpu_custom_call.1} parent=1 // pred_region
      %57 = sst [smem:[#allocation10]] [#allocation15]
      %58 = sst [smem:[#allocation11]] [#allocation14]
    $region13: #{tpu_custom_call.1} parent=1 // pred_fallthru
      _
    %60 = shalt.err (0)
    %s62 = sshll.u32 %s52, 4
    %s63 = int_to_ptr.hbm [resolvable:$true] %s62
    %s64 = sshll.u32 %s53, 4
    %s65 = int_to_ptr.vmem [resolvable:$true] %s64
    %67 = dma.hbm_to_vmem [thread:$0]  %s63, 16, %s65, %s54
    %s68 = sadd.s32 %s16, 3
    %s69 = sld [smem:[#allocation5 + %s68]]
    %s70 = scalar_lea.hbm %s1, %s69
    %s71 = scalar_lea.vmem [#allocation2], 3
    %s72 = scalar_lea.sflag [#allocation3], 3
    // Predicated region
    $region14: #{tpu_custom_call.1} parent=1 // pred_check
      _
    $region15: #{tpu_custom_call.1} parent=1 // pred_check_branch
      %74 = sbr.rel target = $region17
    $region16: #{tpu_custom_call.1} parent=1 // pred_region
      %75 = sst [smem:[#allocation10]] [#allocation17]
      %76 = sst [smem:[#allocation11]] [#allocation16]
    $region17: #{tpu_custom_call.1} parent=1 // pred_fallthru
      _
    %78 = shalt.err (0)
    %s80 = sshll.u32 %s70, 4
    %s81 = int_to_ptr.hbm [resolvable:$true] %s80
    %s82 = sshll.u32 %s71, 4
    %s83 = int_to_ptr.vmem [resolvable:$true] %s82
    %85 = dma.hbm_to_vmem [thread:$0]  %s81, 16, %s83, %s72
    %s86 = sadd.s32 %s16, 4
    %s87 = sld [smem:[#allocation5 + %s86]]
    %s88 = scalar_lea.hbm %s1, %s87
    %s89 = scalar_lea.vmem [#allocation2], 4
    %s90 = scalar_lea.sflag [#allocation3], 4
    // Predicated region
    $region18: #{tpu_custom_call.1} parent=1 // pred_check
      _
    $region19: #{tpu_custom_call.1} parent=1 // pred_check_branch
      %92 = sbr.rel target = $region21
    $region20: #{tpu_custom_call.1} parent=1 // pred_region
      %93 = sst [smem:[#allocation10]] [#allocation19]
      %94 = sst [smem:[#allocation11]] [#allocation18]
    $region21: #{tpu_custom_call.1} parent=1 // pred_fallthru
      _
    %96 = shalt.err (0)
    %s98 = sshll.u32 %s88, 4
    %s99 = int_to_ptr.hbm [resolvable:$true] %s98
    %s100 = sshll.u32 %s89, 4
    %s101 = int_to_ptr.vmem [resolvable:$true] %s100
    %103 = dma.hbm_to_vmem [thread:$0]  %s99, 16, %s101, %s90
    %s104 = sadd.s32 %s16, 5
    %s105 = sld [smem:[#allocation5 + %s104]]
    %s106 = scalar_lea.hbm %s1, %s105
    %s107 = scalar_lea.vmem [#allocation2], 5
    %s108 = scalar_lea.sflag [#allocation3], 5
    // Predicated region
    $region22: #{tpu_custom_call.1} parent=1 // pred_check
      _
    $region23: #{tpu_custom_call.1} parent=1 // pred_check_branch
      %110 = sbr.rel target = $region25
    $region24: #{tpu_custom_call.1} parent=1 // pred_region
      %111 = sst [smem:[#allocation10]] [#allocation21]
      %112 = sst [smem:[#allocation11]] [#allocation20]
    $region25: #{tpu_custom_call.1} parent=1 // pred_fallthru
      _
    %114 = shalt.err (0)
    %s116 = sshll.u32 %s106, 4
    %s117 = int_to_ptr.hbm [resolvable:$true] %s116
    %s118 = sshll.u32 %s107, 4
    %s119 = int_to_ptr.vmem [resolvable:$true] %s118
    %121 = dma.hbm_to_vmem [thread:$0]  %s117, 16, %s119, %s108
    %s122 = sadd.s32 %s16, 6
    %s123 = sld [smem:[#allocation5 + %s122]]
    %s124 = scalar_lea.hbm %s1, %s123
    %s125 = scalar_lea.vmem [#allocation2], 6
    %s126 = scalar_lea.sflag [#allocation3], 6
    // Predicated region
    $region26: #{tpu_custom_call.1} parent=1 // pred_check
      _
    $region27: #{tpu_custom_call.1} parent=1 // pred_check_branch
      %128 = sbr.rel target = $region29
    $region28: #{tpu_custom_call.1} parent=1 // pred_region
      %129 = sst [smem:[#allocation10]] [#allocation23]
      %130 = sst [smem:[#allocation11]] [#allocation22]
    $region29: #{tpu_custom_call.1} parent=1 // pred_fallthru
      _
    %132 = shalt.err (0)
    %s134 = sshll.u32 %s124, 4
    %s135 = int_to_ptr.hbm [resolvable:$true] %s134
    %s136 = sshll.u32 %s125, 4
    %s137 = int_to_ptr.vmem [resolvable:$true] %s136
    %139 = dma.hbm_to_vmem [thread:$0]  %s135, 16, %s137, %s126
    %s140 = sadd.s32 %s16, 7
    %s141 = sld [smem:[#allocation5 + %s140]]
    %s142 = scalar_lea.hbm %s1, %s141
    %s143 = scalar_lea.vmem [#allocation2], 7
    %s144 = scalar_lea.sflag [#allocation3], 7
    // Predicated region
    $region30: #{tpu_custom_call.1} parent=1 // pred_check
      _
    $region31: #{tpu_custom_call.1} parent=1 // pred_check_branch
      %146 = sbr.rel target = $region33
    $region32: #{tpu_custom_call.1} parent=1 // pred_region
      %147 = sst [smem:[#allocation10]] [#allocation25]
      %148 = sst [smem:[#allocation11]] [#allocation24]
    $region33: #{tpu_custom_call.1} parent=1 // pred_fallthru
      _
    %150 = shalt.err (0)
    %s152 = sshll.u32 %s142, 4
    %s153 = int_to_ptr.hbm [resolvable:$true] %s152
    %s154 = sshll.u32 %s143, 4
    %s155 = int_to_ptr.vmem [resolvable:$true] %s154
    %157 = dma.hbm_to_vmem [thread:$0]  %s153, 16, %s155, %s144
    loop: start=0, step=1, limit=2
    $region34: #{tpu_custom_call.1} parent=1 // loop_pre_header
      _
    $region35: #{tpu_custom_call.1} parent=1 // loop_header
      %s159 = sphi 0, %s163
      %p160 = scmp.ge.s32.totalorder %s159, 2
    $region36: #{tpu_custom_call.1} parent=1 // loop_header_branch
      %162 = sbr.rel (%p160) target = $region40
    $region37: #{tpu_custom_call.1} parent=1 // loop_body
      %s164 = sand.u32 %s159, 1
      %s165 = smul.u32 %s164, 8
      %s166 = scalar_lea.sflag [#allocation3], %s165
      %s167 = smul.u32 1, 1
      %s168 = sshll.u32 %s167, 4
      %169 = dma.done %s166, %s168
      %s170 = sadd.s32 1, %s165
      %s171 = scalar_lea.sflag [#allocation3], %s170
      %s172 = sshll.u32 %s167, 4
      %173 = dma.done %s171, %s172
      %s174 = sadd.s32 2, %s165
      %s175 = scalar_lea.sflag [#allocation3], %s174
      %s176 = sshll.u32 %s167, 4
      %177 = dma.done %s175, %s176
      %s178 = sadd.s32 3, %s165
      %s179 = scalar_lea.sflag [#allocation3], %s178
      %s180 = sshll.u32 %s167, 4
      %181 = dma.done %s179, %s180
      %s182 = sadd.s32 4, %s165
      %s183 = scalar_lea.sflag [#allocation3], %s182
      %s184 = sshll.u32 %s167, 4
      %185 = dma.done %s183, %s184
      %s186 = sadd.s32 5, %s165
      %s187 = scalar_lea.sflag [#allocation3], %s186
      %s188 = sshll.u32 %s167, 4
      %189 = dma.done %s187, %s188
      %s190 = sadd.s32 6, %s165
      %s191 = scalar_lea.sflag [#allocation3], %s190
      %s192 = sshll.u32 %s167, 4
      %193 = dma.done %s191, %s192
      %s194 = sadd.s32 7, %s165
      %s195 = scalar_lea.sflag [#allocation3], %s194
      %s196 = sshll.u32 %s167, 4
      %197 = dma.done %s195, %s196
      %s198 = sadd.s32 %s159, 1
      %p199 = scmp.lt.s32.totalorder %s198, 2
      // Predicated region
      $region41: #{tpu_custom_call.1} parent=37 // pred_check
        %p200 = pneg %p199
      $region42: #{tpu_custom_call.1} parent=37 // pred_check_branch
        %202 = sbr.rel (%p200) target = $region44
      $region43: #{tpu_custom_call.1} parent=37 // pred_region
        %s203 = ssub.s32 1, %s164
        %s204 = smul.u32 %s198, 8
        %s205 = sadd.s32 %s16, %s204
        %s206 = sld [smem:[#allocation5 + %s205]]
        %s207 = scalar_lea.hbm %s1, %s206
        %s208 = smul.u32 %s203, 8
        %s209 = scalar_lea.vmem [#allocation2], %s208
        %s210 = scalar_lea.sflag [#allocation3], %s208
        // Predicated region
        $region45: #{tpu_custom_call.1} parent=43 // pred_check
          _
        $region46: #{tpu_custom_call.1} parent=43 // pred_check_branch
          %212 = sbr.rel target = $region48
        $region47: #{tpu_custom_call.1} parent=43 // pred_region
          %213 = sst [smem:[#allocation10]] [#allocation27]
          %214 = sst [smem:[#allocation11]] [#allocation26]
        $region48: #{tpu_custom_call.1} parent=43 // pred_fallthru
          _
        %216 = shalt.err (0)
        %s218 = sshll.u32 %s207, 4
        %s219 = int_to_ptr.hbm [resolvable:$true] %s218
        %s220 = sshll.u32 %s209, 4
        %s221 = int_to_ptr.vmem [resolvable:$true] %s220
        %223 = dma.hbm_to_vmem [thread:$0]  %s219, 16, %s221, %s210
        %s224 = sadd.s32 %s205, 1
        %s225 = sld [smem:[#allocation5 + %s224]]
        %s226 = scalar_lea.hbm %s1, %s225
        %s227 = sadd.s32 1, %s208
        %s228 = scalar_lea.vmem [#allocation2], %s227
        %s229 = scalar_lea.sflag [#allocation3], %s227
        // Predicated region
        $region49: #{tpu_custom_call.1} parent=43 // pred_check
          _
        $region50: #{tpu_custom_call.1} parent=43 // pred_check_branch
          %231 = sbr.rel target = $region52
        $region51: #{tpu_custom_call.1} parent=43 // pred_region
          %232 = sst [smem:[#allocation10]] [#allocation29]
          %233 = sst [smem:[#allocation11]] [#allocation28]
        $region52: #{tpu_custom_call.1} parent=43 // pred_fallthru
          _
        %235 = shalt.err (0)
        %s237 = sshll.u32 %s226, 4
        %s238 = int_to_ptr.hbm [resolvable:$true] %s237
        %s239 = sshll.u32 %s228, 4
        %s240 = int_to_ptr.vmem [resolvable:$true] %s239
        %242 = dma.hbm_to_vmem [thread:$0]  %s238, 16, %s240, %s229
        %s243 = sadd.s32 %s205, 2
        %s244 = sld [smem:[#allocation5 + %s243]]
        %s245 = scalar_lea.hbm %s1, %s244
        %s246 = sadd.s32 2, %s208
        %s247 = scalar_lea.vmem [#allocation2], %s246
        %s248 = scalar_lea.sflag [#allocation3], %s246
        // Predicated region
        $region53: #{tpu_custom_call.1} parent=43 // pred_check
          _
        $region54: #{tpu_custom_call.1} parent=43 // pred_check_branch
          %250 = sbr.rel target = $region56
        $region55: #{tpu_custom_call.1} parent=43 // pred_region
          %251 = sst [smem:[#allocation10]] [#allocation31]
          %252 = sst [smem:[#allocation11]] [#allocation30]
        $region56: #{tpu_custom_call.1} parent=43 // pred_fallthru
          _
        %254 = shalt.err (0)
        %s256 = sshll.u32 %s245, 4
        %s257 = int_to_ptr.hbm [resolvable:$true] %s256
        %s258 = sshll.u32 %s247, 4
        %s259 = int_to_ptr.vmem [resolvable:$true] %s258
        %261 = dma.hbm_to_vmem [thread:$0]  %s257, 16, %s259, %s248
        %s262 = sadd.s32 %s205, 3
        %s263 = sld [smem:[#allocation5 + %s262]]
        %s264 = scalar_lea.hbm %s1, %s263
        %s265 = sadd.s32 3, %s208
        %s266 = scalar_lea.vmem [#allocation2], %s265
        %s267 = scalar_lea.sflag [#allocation3], %s265
        // Predicated region
        $region57: #{tpu_custom_call.1} parent=43 // pred_check
          _
        $region58: #{tpu_custom_call.1} parent=43 // pred_check_branch
          %269 = sbr.rel target = $region60
        $region59: #{tpu_custom_call.1} parent=43 // pred_region
          %270 = sst [smem:[#allocation10]] [#allocation33]
          %271 = sst [smem:[#allocation11]] [#allocation32]
        $region60: #{tpu_custom_call.1} parent=43 // pred_fallthru
          _
        %273 = shalt.err (0)
        %s275 = sshll.u32 %s264, 4
        %s276 = int_to_ptr.hbm [resolvable:$true] %s275
        %s277 = sshll.u32 %s266, 4
        %s278 = int_to_ptr.vmem [resolvable:$true] %s277
        %280 = dma.hbm_to_vmem [thread:$0]  %s276, 16, %s278, %s267
        %s281 = sadd.s32 %s205, 4
        %s282 = sld [smem:[#allocation5 + %s281]]
        %s283 = scalar_lea.hbm %s1, %s282
        %s284 = sadd.s32 4, %s208
        %s285 = scalar_lea.vmem [#allocation2], %s284
        %s286 = scalar_lea.sflag [#allocation3], %s284
        // Predicated region
        $region61: #{tpu_custom_call.1} parent=43 // pred_check
          _
        $region62: #{tpu_custom_call.1} parent=43 // pred_check_branch
          %288 = sbr.rel target = $region64
        $region63: #{tpu_custom_call.1} parent=43 // pred_region
          %289 = sst [smem:[#allocation10]] [#allocation35]
          %290 = sst [smem:[#allocation11]] [#allocation34]
        $region64: #{tpu_custom_call.1} parent=43 // pred_fallthru
          _
        %292 = shalt.err (0)
        %s294 = sshll.u32 %s283, 4
        %s295 = int_to_ptr.hbm [resolvable:$true] %s294
        %s296 = sshll.u32 %s285, 4
        %s297 = int_to_ptr.vmem [resolvable:$true] %s296
        %299 = dma.hbm_to_vmem [thread:$0]  %s295, 16, %s297, %s286
        %s300 = sadd.s32 %s205, 5
        %s301 = sld [smem:[#allocation5 + %s300]]
        %s302 = scalar_lea.hbm %s1, %s301
        %s303 = sadd.s32 5, %s208
        %s304 = scalar_lea.vmem [#allocation2], %s303
        %s305 = scalar_lea.sflag [#allocation3], %s303
        // Predicated region
        $region65: #{tpu_custom_call.1} parent=43 // pred_check
          _
        $region66: #{tpu_custom_call.1} parent=43 // pred_check_branch
          %307 = sbr.rel target = $region68
        $region67: #{tpu_custom_call.1} parent=43 // pred_region
          %308 = sst [smem:[#allocation10]] [#allocation37]
          %309 = sst [smem:[#allocation11]] [#allocation36]
        $region68: #{tpu_custom_call.1} parent=43 // pred_fallthru
          _
        %311 = shalt.err (0)
        %s313 = sshll.u32 %s302, 4
        %s314 = int_to_ptr.hbm [resolvable:$true] %s313
        %s315 = sshll.u32 %s304, 4
        %s316 = int_to_ptr.vmem [resolvable:$true] %s315
        %318 = dma.hbm_to_vmem [thread:$0]  %s314, 16, %s316, %s305
        %s319 = sadd.s32 %s205, 6
        %s320 = sld [smem:[#allocation5 + %s319]]
        %s321 = scalar_lea.hbm %s1, %s320
        %s322 = sadd.s32 6, %s208
        %s323 = scalar_lea.vmem [#allocation2], %s322
        %s324 = scalar_lea.sflag [#allocation3], %s322
        // Predicated region
        $region69: #{tpu_custom_call.1} parent=43 // pred_check
          _
        $region70: #{tpu_custom_call.1} parent=43 // pred_check_branch
          %326 = sbr.rel target = $region72
        $region71: #{tpu_custom_call.1} parent=43 // pred_region
          %327 = sst [smem:[#allocation10]] [#allocation39]
          %328 = sst [smem:[#allocation11]] [#allocation38]
        $region72: #{tpu_custom_call.1} parent=43 // pred_fallthru
          _
        %330 = shalt.err (0)
        %s332 = sshll.u32 %s321, 4
        %s333 = int_to_ptr.hbm [resolvable:$true] %s332
        %s334 = sshll.u32 %s323, 4
        %s335 = int_to_ptr.vmem [resolvable:$true] %s334
        %337 = dma.hbm_to_vmem [thread:$0]  %s333, 16, %s335, %s324
        %s338 = sadd.s32 %s205, 7
        %s339 = sld [smem:[#allocation5 + %s338]]
        %s340 = scalar_lea.hbm %s1, %s339
        %s341 = sadd.s32 7, %s208
        %s342 = scalar_lea.vmem [#allocation2], %s341
        %s343 = scalar_lea.sflag [#allocation3], %s341
        // Predicated region
        $region73: #{tpu_custom_call.1} parent=43 // pred_check
          _
        $region74: #{tpu_custom_call.1} parent=43 // pred_check_branch
          %345 = sbr.rel target = $region76
        $region75: #{tpu_custom_call.1} parent=43 // pred_region
          %346 = sst [smem:[#allocation10]] [#allocation41]
          %347 = sst [smem:[#allocation11]] [#allocation40]
        $region76: #{tpu_custom_call.1} parent=43 // pred_fallthru
          _
        %349 = shalt.err (0)
        %s351 = sshll.u32 %s340, 4
        %s352 = int_to_ptr.hbm [resolvable:$true] %s351
        %s353 = sshll.u32 %s342, 4
        %s354 = int_to_ptr.vmem [resolvable:$true] %s353
        %356 = dma.hbm_to_vmem [thread:$0]  %s352, 16, %s354, %s343
      $region44: #{tpu_custom_call.1} parent=37 // pred_fallthru
        _
      %s357 = scalar_lea.vmem [#allocation2], %s165
      %v358 = vld [vmem:[%s357] sm:$0xff]
      %v359 = vmul.f32 %v358, 11.313708
      %s360 = smul.u32 %s159, 8
      %s361 = scalar_lea.vmem [#allocation6], %s360
      %362 = vst [vmem:[%s361] sm:$0xff] %v359
    $region38: #{tpu_custom_call.1} parent=1 // loop_footer
      %s163 = sadd.s32 1, %s159
    $region39: #{tpu_custom_call.1} parent=1 // loop_footer_branch
      %158 = sbr.rel target = $region35
    $region40: #{tpu_custom_call.1} parent=1 // loop_exit
      _
    // Predicated region
    $region77: #{tpu_custom_call.1} parent=1 // pred_check
      _
    $region78: #{tpu_custom_call.1} parent=1 // pred_check_branch
      %364 = sbr.rel (0) target = $region80
    $region79: #{tpu_custom_call.1} parent=1 // pred_region
      %366 = vsyncadd [#allocation7], 0
      %s367 = sshll.u32 [#allocation6], 4
      %s368 = int_to_ptr.vmem [resolvable:$true] %s367
      %s369 = sshll.u32 %s2, 4
      %s370 = int_to_ptr.hbm [resolvable:$true] %s369
      %375 = dma.vmem_to_hbm [thread:$0]  %s368, 256, %s370, [#allocation7], 128, 128, 8
    $region80: #{tpu_custom_call.1} parent=1 // pred_fallthru
      _
    // Predicated region
    $region81: #{tpu_custom_call.1} parent=1 // pred_check
      _
    $region82: #{tpu_custom_call.1} parent=1 // pred_check_branch
      %377 = sbr.rel (0) target = $region84
    $region83: #{tpu_custom_call.1} parent=1 // pred_region
      %379 = dma.done [#allocation7], 256
    $region84: #{tpu_custom_call.1} parent=1 // pred_fallthru
      _
    %380 = vsyncpa [#allocation7], 1
  %381 = vsyncmov [#allocation3]
  %s382 = vpop.sfrf %381
  %p383 = scmp.eq.s32.totalorder %s382, 0
  %p384 = pneg %p383
  %386 = shalt.err (%p384)
  %s387 = scalar_lea.sflag [#allocation3], 1
  %388 = vsyncmov %s387
  %s389 = vpop.sfrf %388
  %p390 = scmp.eq.s32.totalorder %s389, 0
  %p391 = pneg %p390
  %393 = shalt.err (%p391)
  %s394 = scalar_lea.sflag [#allocation3], 2
  %395 = vsyncmov %s394
  %s396 = vpop.sfrf %395
  %p397 = scmp.eq.s32.totalorder %s396, 0
  %p398 = pneg %p397
  %400 = shalt.err (%p398)
  %s401 = scalar_lea.sflag [#allocation3], 3
  %402 = vsyncmov %s401
  %s403 = vpop.sfrf %402
  %p404 = scmp.eq.s32.totalorder %s403, 0
  %p405 = pneg %p404
  %407 = shalt.err (%p405)
  %s408 = scalar_lea.sflag [#allocation3], 4
  %409 = vsyncmov %s408
  %s410 = vpop.sfrf %409
  %p411 = scmp.eq.s32.totalorder %s410, 0
  %p412 = pneg %p411
  %414 = shalt.err (%p412)
  %s415 = scalar_lea.sflag [#allocation3], 5
  %416 = vsyncmov %s415
  %s417 = vpop.sfrf %416
  %p418 = scmp.eq.s32.totalorder %s417, 0
  %p419 = pneg %p418
  %421 = shalt.err (%p419)
  %s422 = scalar_lea.sflag [#allocation3], 6
  %423 = vsyncmov %s422
  %s424 = vpop.sfrf %423
  %p425 = scmp.eq.s32.totalorder %s424, 0
  %p426 = pneg %p425
  %428 = shalt.err (%p426)
  %s429 = scalar_lea.sflag [#allocation3], 7
  %430 = vsyncmov %s429
  %s431 = vpop.sfrf %430
  %p432 = scmp.eq.s32.totalorder %s431, 0
  %p433 = pneg %p432
  %435 = shalt.err (%p433)
  %s436 = scalar_lea.sflag [#allocation3], 8
  %437 = vsyncmov %s436
  %s438 = vpop.sfrf %437
  %p439 = scmp.eq.s32.totalorder %s438, 0
  %p440 = pneg %p439
  %442 = shalt.err (%p440)
  %s443 = scalar_lea.sflag [#allocation3], 9
  %444 = vsyncmov %s443
  %s445 = vpop.sfrf %444
  %p446 = scmp.eq.s32.totalorder %s445, 0
  %p447 = pneg %p446
  %449 = shalt.err (%p447)
  %s450 = scalar_lea.sflag [#allocation3], 10
  %451 = vsyncmov %s450
  %s452 = vpop.sfrf %451
  %p453 = scmp.eq.s32.totalorder %s452, 0
  %p454 = pneg %p453
  %456 = shalt.err (%p454)
  %s457 = scalar_lea.sflag [#allocation3], 11
  %458 = vsyncmov %s457
  %s459 = vpop.sfrf %458
  %p460 = scmp.eq.s32.totalorder %s459, 0
  %p461 = pneg %p460
  %463 = shalt.err (%p461)
  %s464 = scalar_lea.sflag [#allocation3], 12
  %465 = vsyncmov %s464
  %s466 = vpop.sfrf %465
  %p467 = scmp.eq.s32.totalorder %s466, 0
  %p468 = pneg %p467
  %470 = shalt.err (%p468)
  %s471 = scalar_lea.sflag [#allocation3], 13
  %472 = vsyncmov %s471
  %s473 = vpop.sfrf %472
  %p474 = scmp.eq.s32.totalorder %s473, 0
  %p475 = pneg %p474
  %477 = shalt.err (%p475)
  %s478 = scalar_lea.sflag [#allocation3], 14
  %479 = vsyncmov %s478
  %s480 = vpop.sfrf %479
  %p481 = scmp.eq.s32.totalorder %s480, 0
  %p482 = pneg %p481
  %484 = shalt.err (%p482)
  %s485 = scalar_lea.sflag [#allocation3], 15
  %486 = vsyncmov %s485
  %s487 = vpop.sfrf %486
  %p488 = scmp.eq.s32.totalorder %s487, 0
  %p489 = pneg %p488
  %491 = shalt.err (%p489)

</llo_original>
